<compile_context>
chip_gen: v7x
topology: tpu7x:2x2x1
jax: 0.10.0
libtpu: 0.0.40
codegen_flags: <defaults>
</compile_context>

<pallas_src>
import numpy as np
import jax
import jax.numpy as jnp
from jax.experimental import pallas as pl
from jax.experimental.pallas import tpu as pltpu

_SQRT2 = np.float32(np.sqrt(2.0))


def _mm(a, b):
    # Default MXU precision (single bf16 pass, f32 accumulate) per perf feedback.
    return jnp.dot(a, b, preferred_element_type=jnp.float32)


def _mm_ref(a, b):
    # High-precision matmul for the pure-JAX reference only.
    return jnp.dot(a, b, precision=jax.lax.Precision.HIGHEST,
                   preferred_element_type=jnp.float32)


def _gelu_exact(x):
    # torch.nn.GELU() default = exact erf form (kept in f32 on the VPU).
    return 0.5 * x * (1.0 + jax.lax.erf(x / _SQRT2))


# --------------------------------------------------------------------------
# Fused kernel: whole PastDecomposableMixing forward for ONE batch element
# per grid step.  All scales are stacked along the row (time) axis.
# --------------------------------------------------------------------------
def _make_fused_kernel(n_scales, t_sizes):
    n_mix = n_scales - 1
    offs, o = [], 0
    for t in t_sizes:
        offs.append(o)
        o += t

    def kernel(*refs):
        it = iter(refs)
        x_ref = next(it)                                    # (1, T_total, D)
        wc_ref, ws_ref, icr_ref, ici_ref = (next(it) for _ in range(4))
        season_w = [tuple(next(it) for _ in range(4)) for _ in range(n_mix)]
        trend_w = [tuple(next(it) for _ in range(4)) for _ in range(n_mix)]
        cw1_ref, cb1_ref, cw2_ref, cb2_ref = (next(it) for _ in range(4))
        o_ref = next(it)                                    # (1, T_total, D)
        st_ref = next(it)                                   # VMEM scratch (T_total, D)

        x_all = x_ref[0]                                    # (T_total, D): all scales stacked

        # ---- DFT_series_decomp on the stacked slab (rfft/irfft as D-contraction matmuls)
        re = _mm(x_all, wc_ref[...])                        # (T_total, F)  Re{rfft(x)}
        im = _mm(x_all, ws_ref[...])                        # (T_total, F)  Im{rfft(x)}
        freq = jnp.sqrt(re * re + im * im)
        # torch quirk: `freq[0] = 0` zeroes batch element 0, so the *global*
        # topk(freq, 5).min() is exactly 0.0 and the torch mask reduces to
        # (freq <= 0).  The zeroing is reproduced per batch element via program_id.
        # TODO(synk): no in-kernel top-k primitive; this threshold form is exactly
        # equivalent to the reference quirk, not an approximation -- it relies on
        # the reference keeping `freq[0] = 0` + global .min() semantics.
        keep = (pl.program_id(0) != 0).astype(jnp.float32)
        freq = freq * keep
        mask = freq <= jnp.float32(0.0)
        re = jnp.where(mask, 0.0, re)
        im = jnp.where(mask, 0.0, im)
        season_all = _mm(re, icr_ref[...]) + _mm(im, ici_ref[...])   # irfft
        trend_all = x_all - season_all

        seasons = [season_all[offs[i]:offs[i] + t_sizes[i], :] for i in range(n_scales)]
        trends = [trend_all[offs[i]:offs[i] + t_sizes[i], :] for i in range(n_scales)]

        # Time-mixing MLP in [T, D] layout: weights are pre-transposed at the
        # wrapper so the time (sublane) axis is contracted with plain matmuls
        # and no activation permutes are needed.
        def time_mlp(x, w1t_ref, b1_ref, w2t_ref, b2_ref):
            h = _gelu_exact(_mm(w1t_ref[...], x) + b1_ref[...])      # (T_out, D)
            return _mm(w2t_ref[...], h) + b2_ref[...]                # (T_out, D)

        # ---- MultiScaleSeasonMixing (bottom-up)
        out_high, out_low = seasons[0], seasons[1]
        out_season = [out_high]
        for i in range(n_mix):
            w1t, b1, w2t, b2 = season_w[i]
            out_low = out_low + time_mlp(out_high, w1t, b1, w2t, b2)
            out_high = out_low
            if i + 2 <= n_scales - 1:
                out_low = seasons[i + 2]
            out_season.append(out_high)

        # ---- MultiScaleTrendMixing (top-down)
        trends_rev = list(reversed(trends))
        out_low, out_high = trends_rev[0], trends_rev[1]
        out_trend_rev = [out_low]
        for i in range(n_mix):
            w1t, b1, w2t, b2 = trend_w[i]
            out_high = out_high + time_mlp(out_low, w1t, b1, w2t, b2)
            out_low = out_high
            if i + 2 <= n_scales - 1:
                out_high = trends_rev[i + 2]
            out_trend_rev.append(out_low)
        out_trend = list(reversed(out_trend_rev))

        # ---- out = ori + out_cross_layer(season + trend)
        # Shared weights -> assemble one (T_total, D) slab (via VMEM scratch,
        # static aligned-row stores) and run a single pair of matmuls.
        for i in range(n_scales):
            st_ref[offs[i]:offs[i] + t_sizes[i], :] = out_season[i] + out_trend[i]
        st_all = st_ref[...]
        h = _gelu_exact(_mm(st_all, cw1_ref[...]) + cb1_ref[...])    # (T_total, d_ff)
        y = _mm(h, cw2_ref[...]) + cb2_ref[...]                      # (T_total, D)
        o_ref[0] = x_all + y

    return kernel


# --------------------------------------------------------------------------
# Wrapper: one pallas_call for the whole forward.
# --------------------------------------------------------------------------
def past_decomposable_mixing(x_list, params):
    assert len(x_list) >= 2
    n_scales = len(x_list)
    B, _, D = x_list[0].shape
    t_sizes = tuple(int(x.shape[1]) for x in x_list)
    t_total = int(sum(t_sizes))

    # Stack all scales along time: [B, sum(T_i), D].  Pure row-major stack,
    # D stays on the lane axis throughout (no transposes anywhere).
    x_all = jnp.concatenate(x_list, axis=1)

    wc, ws, icr, ici = params["dft"]

    inputs = [x_all, wc, ws, icr, ici]
    for grp in ("season", "trend"):
        for (w1, b1, w2, b2) in params[grp]:
            # Pre-transpose time-mixing weights so the kernel contracts the time
            # axis with a standard (T_out, T_in) @ (T_in, D) matmul; biases become
            # (T_out, 1) columns that broadcast along lanes.
            inputs += [w1.T, b1.reshape(-1, 1), w2.T, b2.reshape(-1, 1)]
    cw1, cb1, cw2, cb2 = params["out_cross"]
    inputs += [cw1, cb1.reshape(1, -1), cw2, cb2.reshape(1, -1)]

    x_spec = pl.BlockSpec((1, t_total, D), lambda b: (b, 0, 0))
    in_specs = [x_spec]
    for arr in inputs[1:]:
        in_specs.append(pl.BlockSpec(arr.shape, lambda b, _nd=arr.ndim: (0,) * _nd))

    out_all = pl.pallas_call(
        _make_fused_kernel(n_scales, t_sizes),
        out_shape=jax.ShapeDtypeStruct((B, t_total, D), jnp.float32),
        grid=(B,),
        in_specs=in_specs,
        out_specs=pl.BlockSpec((1, t_total, D), lambda b: (b, 0, 0)),
        scratch_shapes=[pltpu.VMEM((t_total, D), jnp.float32)],
        compiler_params=pltpu.CompilerParams(
            dimension_semantics=("parallel",)),   # B=2 -> both TCs on v7x
    )(*inputs)

    outs, off = [], 0
    for t in t_sizes:                      # split scales; also the out[:, :length, :] slice
        outs.append(out_all[:, off:off + t, :])
        off += t
    return outs


# --------------------------------------------------------------------------
# Parameter construction (deterministic, synthetic)
# --------------------------------------------------------------------------
def _dft_matrices(D):
    F = D // 2 + 1
    d = np.arange(D, dtype=np.float64)[:, None]
    f = np.arange(F, dtype=np.float64)[None, :]
    ang = 2.0 * np.pi * d * f / D
    wc = np.cos(ang)            # (D, F): re = x @ wc
    ws = -np.sin(ang)           # (D, F): im = x @ ws
    c = np.full((F,), 2.0)
    c[0] = 1.0
    if D % 2 == 0:
        c[-1] = 1.0
    n = np.arange(D, dtype=np.float64)[None, :]
    fk = np.arange(F, dtype=np.float64)[:, None]
    ang2 = 2.0 * np.pi * fk * n / D
    icr = (c[:, None] / D) * np.cos(ang2)     # (F, D)
    ici = -(c[:, None] / D) * np.sin(ang2)    # (F, D)
    return (jnp.asarray(wc, jnp.float32), jnp.asarray(ws, jnp.float32),
            jnp.asarray(icr, jnp.float32), jnp.asarray(ici, jnp.float32))


def _init_linear(key, fan_in, fan_out):
    k1, k2 = jax.random.split(key)
    bound = 1.0 / np.sqrt(fan_in)
    w = jax.random.uniform(k1, (fan_in, fan_out), jnp.float32, -bound, bound)
    b = jax.random.uniform(k2, (fan_out,), jnp.float32, -bound, bound)
    return w, b


def init_params(key, cfg):
    L = cfg["down_sampling_layers"]
    sl, w = cfg["seq_len"], cfg["down_sampling_window"]
    d_model, d_ff = cfg["d_model"], cfg["d_ff"]
    keys = iter(jax.random.split(key, 4 * L + 2))
    season = []
    for i in range(L):
        din, dout = sl // w ** i, sl // w ** (i + 1)
        w1, b1 = _init_linear(next(keys), din, dout)
        w2, b2 = _init_linear(next(keys), dout, dout)
        season.append((w1, b1, w2, b2))
    trend = []
    for i in range(L):
        j = L - 1 - i                     # ModuleList built with reversed(range(L))
        din, dout = sl // w ** (j + 1), sl // w ** j
        w1, b1 = _init_linear(next(keys), din, dout)
        w2, b2 = _init_linear(next(keys), dout, dout)
        trend.append((w1, b1, w2, b2))
    w1, b1 = _init_linear(next(keys), d_model, d_ff)
    w2, b2 = _init_linear(next(keys), d_ff, d_model)
    return {"season": season, "trend": trend, "out_cross": (w1, b1, w2, b2),
            "dft": _dft_matrices(d_model)}


# --------------------------------------------------------------------------
# Pure-JAX reference (mirrors PyTorch semantics, incl. the topk quirk;
# uses jnp.fft + HIGHEST-precision matmuls as an independent check).
# --------------------------------------------------------------------------
def _ref_forward(x_list, params):
    def decomp(x):
        xf = jnp.fft.rfft(x, axis=-1)
        freq = jnp.abs(xf)
        freq = freq.at[0].set(0.0)                 # torch: freq[0] = 0
        thresh = jax.lax.top_k(freq, 5)[0].min()   # global min over top-k values
        xf = jnp.where(freq <= thresh, jnp.zeros_like(xf), xf)
        season = jnp.fft.irfft(xf, axis=-1)
        return season, x - season

    def mlp(x, w1, b1, w2, b2):
        return _mm_ref(_gelu_exact(_mm_ref(x, w1) + b1), w2) + b2

    length_list = [x.shape[1] for x in x_list]
    season_list, trend_list = [], []
    for x in x_list:
        s, t = decomp(x)
        season_list.append(jnp.transpose(s, (0, 2, 1)))
        trend_list.append(jnp.transpose(t, (0, 2, 1)))

    out_high, out_low = season_list[0], season_list[1]
    out_season_list = [jnp.transpose(out_high, (0, 2, 1))]
    for i in range(len(season_list) - 1):
        w1, b1, w2, b2 = params["season"][i]
        out_low = out_low + mlp(out_high, w1, b1, w2, b2)
        out_high = out_low
        if i + 2 <= len(season_list) - 1:
            out_low = season_list[i + 2]
        out_season_list.append(jnp.transpose(out_high, (0, 2, 1)))

    trend_rev = list(reversed(trend_list))
    out_low, out_high = trend_rev[0], trend_rev[1]
    out_trend_list = [jnp.transpose(out_low, (0, 2, 1))]
    for i in range(len(trend_rev) - 1):
        w1, b1, w2, b2 = params["trend"][i]
        out_high = out_high + mlp(out_low, w1, b1, w2, b2)
        out_low = out_high
        if i + 2 <= len(trend_rev) - 1:
            out_high = trend_rev[i + 2]
        out_trend_list.append(jnp.transpose(out_low, (0, 2, 1)))
    out_trend_list.reverse()

    w1, b1, w2, b2 = params["out_cross"]
    outs = []
    for ori, s, t, length in zip(x_list, out_season_list, out_trend_list, length_list):
        out = ori + mlp(s + t, w1, b1, w2, b2)
        outs.append(out[:, :length, :])
    return outs


if __name__ == "__main__":
    cfg = dict(seq_len=16, down_sampling_window=2, down_sampling_layers=2,
               d_model=32, d_ff=64, top_k=5, channel_independence=1)
    B = 2

    root = jax.random.PRNGKey(0)
    kx, kp = jax.random.split(root)
    params = init_params(kp, cfg)

    # x_list: one tensor per down-sampling scale, [B, T_i, d_model]
    x_keys = jax.random.split(kx, cfg["down_sampling_layers"] + 1)
    x_list = [
        jax.random.normal(
            x_keys[i],
            (B, cfg["seq_len"] // cfg["down_sampling_window"] ** i, cfg["d_model"]),
            jnp.float32)
        for i in range(cfg["down_sampling_layers"] + 1)
    ]

    out_list = past_decomposable_mixing(x_list, params)
    out_list = [jax.block_until_ready(o) for o in out_list]

    ref_list = _ref_forward(x_list, params)
    # Tolerance note: the kernel uses default MXU precision (single bf16 pass,
    # per perf review) while the reference uses f32 FFT + HIGHEST-precision
    # matmuls, so ~1e-2-level disagreement is expected; structural errors would
    # show up at O(1).
    for o, r in zip(out_list, ref_list):
        assert o.shape == r.shape, (o.shape, r.shape)
        err = float(jnp.max(jnp.abs(o - r)))
        assert np.allclose(np.asarray(o), np.asarray(r), rtol=3e-2, atol=3e-2), err

    print("KERNEL_OK")
</pallas_src>

<mosaic_0001>
module attributes {stable_mosaic.version = 11 : i64} {
  func.func @kernel(%arg0: i32, %arg1: memref<1x28x32xf32, #tpu.memory_space<vmem>>, %arg2: memref<32x17xf32, #tpu.memory_space<vmem>>, %arg3: memref<32x17xf32, #tpu.memory_space<vmem>>, %arg4: memref<17x32xf32, #tpu.memory_space<vmem>>, %arg5: memref<17x32xf32, #tpu.memory_space<vmem>>, %arg6: memref<8x16xf32, #tpu.memory_space<vmem>>, %arg7: memref<8x1xf32, #tpu.memory_space<vmem>>, %arg8: memref<8x8xf32, #tpu.memory_space<vmem>>, %arg9: memref<8x1xf32, #tpu.memory_space<vmem>>, %arg10: memref<4x8xf32, #tpu.memory_space<vmem>>, %arg11: memref<4x1xf32, #tpu.memory_space<vmem>>, %arg12: memref<4x4xf32, #tpu.memory_space<vmem>>, %arg13: memref<4x1xf32, #tpu.memory_space<vmem>>, %arg14: memref<8x4xf32, #tpu.memory_space<vmem>>, %arg15: memref<8x1xf32, #tpu.memory_space<vmem>>, %arg16: memref<8x8xf32, #tpu.memory_space<vmem>>, %arg17: memref<8x1xf32, #tpu.memory_space<vmem>>, %arg18: memref<16x8xf32, #tpu.memory_space<vmem>>, %arg19: memref<16x1xf32, #tpu.memory_space<vmem>>, %arg20: memref<16x16xf32, #tpu.memory_space<vmem>>, %arg21: memref<16x1xf32, #tpu.memory_space<vmem>>, %arg22: memref<32x64xf32, #tpu.memory_space<vmem>>, %arg23: memref<1x64xf32, #tpu.memory_space<vmem>>, %arg24: memref<64x32xf32, #tpu.memory_space<vmem>>, %arg25: memref<1x32xf32, #tpu.memory_space<vmem>>, %arg26: memref<1x28x32xf32, #tpu.memory_space<vmem>>, %arg27: memref<28x32xf32, #tpu.memory_space<vmem>>) attributes {dimension_semantics = [#tpu.dimension_semantics<parallel>], iteration_bounds = array<i64: 2>, scalar_prefetch = 0 : i64, scratch_operands = 1 : i64, tpu.core_type = #tpu.core_type<tc>, window_params = [{transform_indices = @transform_0, window_bounds = array<i64: 1, 28, 32>}, {pipeline_mode = #tpu.pipeline_mode<synchronous>, transform_indices = @transform_1, window_bounds = array<i64: 32, 17>}, {pipeline_mode = #tpu.pipeline_mode<synchronous>, transform_indices = @transform_2, window_bounds = array<i64: 32, 17>}, {pipeline_mode = #tpu.pipeline_mode<synchronous>, transform_indices = @transform_3, window_bounds = array<i64: 17, 32>}, {pipeline_mode = #tpu.pipeline_mode<synchronous>, transform_indices = @transform_4, window_bounds = array<i64: 17, 32>}, {pipeline_mode = #tpu.pipeline_mode<synchronous>, transform_indices = @transform_5, window_bounds = array<i64: 8, 16>}, {pipeline_mode = #tpu.pipeline_mode<synchronous>, transform_indices = @transform_6, window_bounds = array<i64: 8, 1>}, {pipeline_mode = #tpu.pipeline_mode<synchronous>, transform_indices = @transform_7, window_bounds = array<i64: 8, 8>}, {pipeline_mode = #tpu.pipeline_mode<synchronous>, transform_indices = @transform_8, window_bounds = array<i64: 8, 1>}, {pipeline_mode = #tpu.pipeline_mode<synchronous>, transform_indices = @transform_9, window_bounds = array<i64: 4, 8>}, {pipeline_mode = #tpu.pipeline_mode<synchronous>, transform_indices = @transform_10, window_bounds = array<i64: 4, 1>}, {pipeline_mode = #tpu.pipeline_mode<synchronous>, transform_indices = @transform_11, window_bounds = array<i64: 4, 4>}, {pipeline_mode = #tpu.pipeline_mode<synchronous>, transform_indices = @transform_12, window_bounds = array<i64: 4, 1>}, {pipeline_mode = #tpu.pipeline_mode<synchronous>, transform_indices = @transform_13, window_bounds = array<i64: 8, 4>}, {pipeline_mode = #tpu.pipeline_mode<synchronous>, transform_indices = @transform_14, window_bounds = array<i64: 8, 1>}, {pipeline_mode = #tpu.pipeline_mode<synchronous>, transform_indices = @transform_15, window_bounds = array<i64: 8, 8>}, {pipeline_mode = #tpu.pipeline_mode<synchronous>, transform_indices = @transform_16, window_bounds = array<i64: 8, 1>}, {pipeline_mode = #tpu.pipeline_mode<synchronous>, transform_indices = @transform_17, window_bounds = array<i64: 16, 8>}, {pipeline_mode = #tpu.pipeline_mode<synchronous>, transform_indices = @transform_18, window_bounds = array<i64: 16, 1>}, {pipeline_mode = #tpu.pipeline_mode<synchronous>, transform_indices = @transform_19, window_bounds = array<i64: 16, 16>}, {pipeline_mode = #tpu.pipeline_mode<synchronous>, transform_indices = @transform_20, window_bounds = array<i64: 16, 1>}, {pipeline_mode = #tpu.pipeline_mode<synchronous>, transform_indices = @transform_21, window_bounds = array<i64: 32, 64>}, {pipeline_mode = #tpu.pipeline_mode<synchronous>, transform_indices = @transform_22, window_bounds = array<i64: 1, 64>}, {pipeline_mode = #tpu.pipeline_mode<synchronous>, transform_indices = @transform_23, window_bounds = array<i64: 64, 32>}, {pipeline_mode = #tpu.pipeline_mode<synchronous>, transform_indices = @transform_24, window_bounds = array<i64: 1, 32>}, {transform_indices = @transform_25, window_bounds = array<i64: 1, 28, 32>}]} {
    %c0 = arith.constant 0 : index
    %c0_0 = arith.constant 0 : index
    %c0_1 = arith.constant 0 : index
    %0 = vector.load %arg1[%c0, %c0_0, %c0_1] : memref<1x28x32xf32, #tpu.memory_space<vmem>>, vector<1x28x32xf32>
    %1 = vector.shape_cast %0 : vector<1x28x32xf32> to vector<28x32xf32>
    %c0_2 = arith.constant 0 : index
    %c0_3 = arith.constant 0 : index
    %2 = vector.load %arg2[%c0_2, %c0_3] : memref<32x17xf32, #tpu.memory_space<vmem>>, vector<32x17xf32>
    %cst = arith.constant dense<0.000000e+00> : vector<28x17xf32>
    %3 = tpu.matmul %1, %2, %cst {dimension_numbers = #tpu.dot_dimension_numbers<[1], [0], [0], [1], [0, 0, 1, 1], [], []>} : vector<28x32xf32>, vector<32x17xf32>, vector<28x17xf32> -> vector<28x17xf32>
    %c0_4 = arith.constant 0 : index
    %c0_5 = arith.constant 0 : index
    %4 = vector.load %arg3[%c0_4, %c0_5] : memref<32x17xf32, #tpu.memory_space<vmem>>, vector<32x17xf32>
    %cst_6 = arith.constant dense<0.000000e+00> : vector<28x17xf32>
    %5 = tpu.matmul %1, %4, %cst_6 {dimension_numbers = #tpu.dot_dimension_numbers<[1], [0], [0], [1], [0, 0, 1, 1], [], []>} : vector<28x32xf32>, vector<32x17xf32>, vector<28x17xf32> -> vector<28x17xf32>
    %6 = arith.mulf %3, %3 : vector<28x17xf32>
    %7 = arith.mulf %5, %5 : vector<28x17xf32>
    %8 = arith.addf %6, %7 : vector<28x17xf32>
    %9 = math.sqrt %8 : vector<28x17xf32>
    %c0_i32 = arith.constant 0 : i32
    %10 = arith.cmpi ne, %arg0, %c0_i32 : i32
    %11 = arith.extui %10 : i1 to i32
    %12 = arith.sitofp %11 : i32 to f32
    %13 = vector.broadcast %12 : f32 to vector<28x17xf32>
    %14 = arith.mulf %9, %13 : vector<28x17xf32>
    %cst_7 = arith.constant 0.000000e+00 : f32
    %15 = vector.broadcast %cst_7 : f32 to vector<28x17xf32>
    %16 = arith.cmpf ole, %14, %15 : vector<28x17xf32>
    %cst_8 = arith.constant 0.000000e+00 : f32
    %17 = vector.broadcast %cst_8 : f32 to vector<28x17xf32>
    %18 = arith.select %16, %17, %3 : vector<28x17xi1>, vector<28x17xf32>
    %cst_9 = arith.constant 0.000000e+00 : f32
    %19 = vector.broadcast %cst_9 : f32 to vector<28x17xf32>
    %20 = arith.select %16, %19, %5 : vector<28x17xi1>, vector<28x17xf32>
    %c0_10 = arith.constant 0 : index
    %c0_11 = arith.constant 0 : index
    %21 = vector.load %arg4[%c0_10, %c0_11] : memref<17x32xf32, #tpu.memory_space<vmem>>, vector<17x32xf32>
    %cst_12 = arith.constant dense<0.000000e+00> : vector<28x32xf32>
    %22 = tpu.matmul %18, %21, %cst_12 {dimension_numbers = #tpu.dot_dimension_numbers<[1], [0], [0], [1], [0, 0, 1, 1], [], []>} : vector<28x17xf32>, vector<17x32xf32>, vector<28x32xf32> -> vector<28x32xf32>
    %c0_13 = arith.constant 0 : index
    %c0_14 = arith.constant 0 : index
    %23 = vector.load %arg5[%c0_13, %c0_14] : memref<17x32xf32, #tpu.memory_space<vmem>>, vector<17x32xf32>
    %cst_15 = arith.constant dense<0.000000e+00> : vector<28x32xf32>
    %24 = tpu.matmul %20, %23, %cst_15 {dimension_numbers = #tpu.dot_dimension_numbers<[1], [0], [0], [1], [0, 0, 1, 1], [], []>} : vector<28x17xf32>, vector<17x32xf32>, vector<28x32xf32> -> vector<28x32xf32>
    %25 = arith.addf %22, %24 : vector<28x32xf32>
    %26 = arith.subf %1, %25 : vector<28x32xf32>
    %27 = vector.extract_strided_slice %25 {offsets = [0, 0], sizes = [16, 32], strides = [1, 1]} : vector<28x32xf32> to vector<16x32xf32>
    %28 = vector.extract_strided_slice %25 {offsets = [16, 0], sizes = [8, 32], strides = [1, 1]} : vector<28x32xf32> to vector<8x32xf32>
    %29 = vector.extract_strided_slice %25 {offsets = [24, 0], sizes = [4, 32], strides = [1, 1]} : vector<28x32xf32> to vector<4x32xf32>
    %30 = vector.extract_strided_slice %26 {offsets = [0, 0], sizes = [16, 32], strides = [1, 1]} : vector<28x32xf32> to vector<16x32xf32>
    %31 = vector.extract_strided_slice %26 {offsets = [16, 0], sizes = [8, 32], strides = [1, 1]} : vector<28x32xf32> to vector<8x32xf32>
    %32 = vector.extract_strided_slice %26 {offsets = [24, 0], sizes = [4, 32], strides = [1, 1]} : vector<28x32xf32> to vector<4x32xf32>
    %c0_16 = arith.constant 0 : index
    %c0_17 = arith.constant 0 : index
    %33 = vector.load %arg6[%c0_16, %c0_17] : memref<8x16xf32, #tpu.memory_space<vmem>>, vector<8x16xf32>
    %cst_18 = arith.constant dense<0.000000e+00> : vector<8x32xf32>
    %34 = tpu.matmul %33, %27, %cst_18 {dimension_numbers = #tpu.dot_dimension_numbers<[1], [0], [0], [1], [0, 0, 1, 1], [], []>} : vector<8x16xf32>, vector<16x32xf32>, vector<8x32xf32> -> vector<8x32xf32>
    %c0_19 = arith.constant 0 : index
    %c0_20 = arith.constant 0 : index
    %35 = vector.load %arg7[%c0_19, %c0_20] : memref<8x1xf32, #tpu.memory_space<vmem>>, vector<8x1xf32>
    %36 = vector.broadcast %35 : vector<8x1xf32> to vector<8x32xf32>
    %37 = arith.addf %34, %36 : vector<8x32xf32>
    %cst_21 = arith.constant 5.000000e-01 : f32
    %38 = vector.broadcast %cst_21 : f32 to vector<8x32xf32>
    %39 = arith.mulf %38, %37 : vector<8x32xf32>
    %cst_22 = arith.constant 1.41421354 : f32
    %40 = vector.broadcast %cst_22 : f32 to vector<8x32xf32>
    %41 = arith.divf %37, %40 : vector<8x32xf32>
    %42 = math.erf %41 : vector<8x32xf32>
    %cst_23 = arith.constant 1.000000e+00 : f32
    %43 = vector.broadcast %cst_23 : f32 to vector<8x32xf32>
    %44 = arith.addf %43, %42 : vector<8x32xf32>
    %45 = arith.mulf %39, %44 : vector<8x32xf32>
    %c0_24 = arith.constant 0 : index
    %c0_25 = arith.constant 0 : index
    %46 = vector.load %arg8[%c0_24, %c0_25] : memref<8x8xf32, #tpu.memory_space<vmem>>, vector<8x8xf32>
    %cst_26 = arith.constant dense<0.000000e+00> : vector<8x32xf32>
    %47 = tpu.matmul %46, %45, %cst_26 {dimension_numbers = #tpu.dot_dimension_numbers<[1], [0], [0], [1], [0, 0, 1, 1], [], []>} : vector<8x8xf32>, vector<8x32xf32>, vector<8x32xf32> -> vector<8x32xf32>
    %c0_27 = arith.constant 0 : index
    %c0_28 = arith.constant 0 : index
    %48 = vector.load %arg9[%c0_27, %c0_28] : memref<8x1xf32, #tpu.memory_space<vmem>>, vector<8x1xf32>
    %49 = vector.broadcast %48 : vector<8x1xf32> to vector<8x32xf32>
    %50 = arith.addf %47, %49 : vector<8x32xf32>
    %51 = arith.addf %28, %50 : vector<8x32xf32>
    %c0_29 = arith.constant 0 : index
    %c0_30 = arith.constant 0 : index
    %52 = vector.load %arg10[%c0_29, %c0_30] : memref<4x8xf32, #tpu.memory_space<vmem>>, vector<4x8xf32>
    %cst_31 = arith.constant dense<0.000000e+00> : vector<4x32xf32>
    %53 = tpu.matmul %52, %51, %cst_31 {dimension_numbers = #tpu.dot_dimension_numbers<[1], [0], [0], [1], [0, 0, 1, 1], [], []>} : vector<4x8xf32>, vector<8x32xf32>, vector<4x32xf32> -> vector<4x32xf32>
    %c0_32 = arith.constant 0 : index
    %c0_33 = arith.constant 0 : index
    %54 = vector.load %arg11[%c0_32, %c0_33] : memref<4x1xf32, #tpu.memory_space<vmem>>, vector<4x1xf32>
    %55 = vector.broadcast %54 : vector<4x1xf32> to vector<4x32xf32>
    %56 = arith.addf %53, %55 : vector<4x32xf32>
    %cst_34 = arith.constant 5.000000e-01 : f32
    %57 = vector.broadcast %cst_34 : f32 to vector<4x32xf32>
    %58 = arith.mulf %57, %56 : vector<4x32xf32>
    %cst_35 = arith.constant 1.41421354 : f32
    %59 = vector.broadcast %cst_35 : f32 to vector<4x32xf32>
    %60 = arith.divf %56, %59 : vector<4x32xf32>
    %61 = math.erf %60 : vector<4x32xf32>
    %cst_36 = arith.constant 1.000000e+00 : f32
    %62 = vector.broadcast %cst_36 : f32 to vector<4x32xf32>
    %63 = arith.addf %62, %61 : vector<4x32xf32>
    %64 = arith.mulf %58, %63 : vector<4x32xf32>
    %c0_37 = arith.constant 0 : index
    %c0_38 = arith.constant 0 : index
    %65 = vector.load %arg12[%c0_37, %c0_38] : memref<4x4xf32, #tpu.memory_space<vmem>>, vector<4x4xf32>
    %cst_39 = arith.constant dense<0.000000e+00> : vector<4x32xf32>
    %66 = tpu.matmul %65, %64, %cst_39 {dimension_numbers = #tpu.dot_dimension_numbers<[1], [0], [0], [1], [0, 0, 1, 1], [], []>} : vector<4x4xf32>, vector<4x32xf32>, vector<4x32xf32> -> vector<4x32xf32>
    %c0_40 = arith.constant 0 : index
    %c0_41 = arith.constant 0 : index
    %67 = vector.load %arg13[%c0_40, %c0_41] : memref<4x1xf32, #tpu.memory_space<vmem>>, vector<4x1xf32>
    %68 = vector.broadcast %67 : vector<4x1xf32> to vector<4x32xf32>
    %69 = arith.addf %66, %68 : vector<4x32xf32>
    %70 = arith.addf %29, %69 : vector<4x32xf32>
    %c0_42 = arith.constant 0 : index
    %c0_43 = arith.constant 0 : index
    %71 = vector.load %arg14[%c0_42, %c0_43] : memref<8x4xf32, #tpu.memory_space<vmem>>, vector<8x4xf32>
    %cst_44 = arith.constant dense<0.000000e+00> : vector<8x32xf32>
    %72 = tpu.matmul %71, %32, %cst_44 {dimension_numbers = #tpu.dot_dimension_numbers<[1], [0], [0], [1], [0, 0, 1, 1], [], []>} : vector<8x4xf32>, vector<4x32xf32>, vector<8x32xf32> -> vector<8x32xf32>
    %c0_45 = arith.constant 0 : index
    %c0_46 = arith.constant 0 : index
    %73 = vector.load %arg15[%c0_45, %c0_46] : memref<8x1xf32, #tpu.memory_space<vmem>>, vector<8x1xf32>
    %74 = vector.broadcast %73 : vector<8x1xf32> to vector<8x32xf32>
    %75 = arith.addf %72, %74 : vector<8x32xf32>
    %cst_47 = arith.constant 5.000000e-01 : f32
    %76 = vector.broadcast %cst_47 : f32 to vector<8x32xf32>
    %77 = arith.mulf %76, %75 : vector<8x32xf32>
    %cst_48 = arith.constant 1.41421354 : f32
    %78 = vector.broadcast %cst_48 : f32 to vector<8x32xf32>
    %79 = arith.divf %75, %78 : vector<8x32xf32>
    %80 = math.erf %79 : vector<8x32xf32>
    %cst_49 = arith.constant 1.000000e+00 : f32
    %81 = vector.broadcast %cst_49 : f32 to vector<8x32xf32>
    %82 = arith.addf %81, %80 : vector<8x32xf32>
    %83 = arith.mulf %77, %82 : vector<8x32xf32>
    %c0_50 = arith.constant 0 : index
    %c0_51 = arith.constant 0 : index
    %84 = vector.load %arg16[%c0_50, %c0_51] : memref<8x8xf32, #tpu.memory_space<vmem>>, vector<8x8xf32>
    %cst_52 = arith.constant dense<0.000000e+00> : vector<8x32xf32>
    %85 = tpu.matmul %84, %83, %cst_52 {dimension_numbers = #tpu.dot_dimension_numbers<[1], [0], [0], [1], [0, 0, 1, 1], [], []>} : vector<8x8xf32>, vector<8x32xf32>, vector<8x32xf32> -> vector<8x32xf32>
    %c0_53 = arith.constant 0 : index
    %c0_54 = arith.constant 0 : index
    %86 = vector.load %arg17[%c0_53, %c0_54] : memref<8x1xf32, #tpu.memory_space<vmem>>, vector<8x1xf32>
    %87 = vector.broadcast %86 : vector<8x1xf32> to vector<8x32xf32>
    %88 = arith.addf %85, %87 : vector<8x32xf32>
    %89 = arith.addf %31, %88 : vector<8x32xf32>
    %c0_55 = arith.constant 0 : index
    %c0_56 = arith.constant 0 : index
    %90 = vector.load %arg18[%c0_55, %c0_56] : memref<16x8xf32, #tpu.memory_space<vmem>>, vector<16x8xf32>
    %cst_57 = arith.constant dense<0.000000e+00> : vector<16x32xf32>
    %91 = tpu.matmul %90, %89, %cst_57 {dimension_numbers = #tpu.dot_dimension_numbers<[1], [0], [0], [1], [0, 0, 1, 1], [], []>} : vector<16x8xf32>, vector<8x32xf32>, vector<16x32xf32> -> vector<16x32xf32>
    %c0_58 = arith.constant 0 : index
    %c0_59 = arith.constant 0 : index
    %92 = vector.load %arg19[%c0_58, %c0_59] : memref<16x1xf32, #tpu.memory_space<vmem>>, vector<16x1xf32>
    %93 = vector.broadcast %92 : vector<16x1xf32> to vector<16x32xf32>
    %94 = arith.addf %91, %93 : vector<16x32xf32>
    %cst_60 = arith.constant 5.000000e-01 : f32
    %95 = vector.broadcast %cst_60 : f32 to vector<16x32xf32>
    %96 = arith.mulf %95, %94 : vector<16x32xf32>
    %cst_61 = arith.constant 1.41421354 : f32
    %97 = vector.broadcast %cst_61 : f32 to vector<16x32xf32>
    %98 = arith.divf %94, %97 : vector<16x32xf32>
    %99 = math.erf %98 : vector<16x32xf32>
    %cst_62 = arith.constant 1.000000e+00 : f32
    %100 = vector.broadcast %cst_62 : f32 to vector<16x32xf32>
    %101 = arith.addf %100, %99 : vector<16x32xf32>
    %102 = arith.mulf %96, %101 : vector<16x32xf32>
    %c0_63 = arith.constant 0 : index
    %c0_64 = arith.constant 0 : index
    %103 = vector.load %arg20[%c0_63, %c0_64] : memref<16x16xf32, #tpu.memory_space<vmem>>, vector<16x16xf32>
    %cst_65 = arith.constant dense<0.000000e+00> : vector<16x32xf32>
    %104 = tpu.matmul %103, %102, %cst_65 {dimension_numbers = #tpu.dot_dimension_numbers<[1], [0], [0], [1], [0, 0, 1, 1], [], []>} : vector<16x16xf32>, vector<16x32xf32>, vector<16x32xf32> -> vector<16x32xf32>
    %c0_66 = arith.constant 0 : index
    %c0_67 = arith.constant 0 : index
    %105 = vector.load %arg21[%c0_66, %c0_67] : memref<16x1xf32, #tpu.memory_space<vmem>>, vector<16x1xf32>
    %106 = vector.broadcast %105 : vector<16x1xf32> to vector<16x32xf32>
    %107 = arith.addf %104, %106 : vector<16x32xf32>
    %108 = arith.addf %30, %107 : vector<16x32xf32>
    %109 = arith.addf %27, %108 : vector<16x32xf32>
    %c0_68 = arith.constant 0 : index
    %c0_69 = arith.constant 0 : index
    %110 = vector.load %arg27[%c0_68, %c0_69] : memref<28x32xf32, #tpu.memory_space<vmem>>, vector<16x32xf32>
    tpu.vector_store %arg27[%c0_68, %c0_69], %109 {strides = array<i32>} : memref<28x32xf32, #tpu.memory_space<vmem>>, vector<16x32xf32>,
    %111 = arith.addf %51, %89 : vector<8x32xf32>
    %c16 = arith.constant 16 : index
    %c0_70 = arith.constant 0 : index
    %112 = vector.load %arg27[%c16, %c0_70] : memref<28x32xf32, #tpu.memory_space<vmem>>, vector<8x32xf32>
    tpu.vector_store %arg27[%c16, %c0_70], %111 {strides = array<i32>} : memref<28x32xf32, #tpu.memory_space<vmem>>, vector<8x32xf32>,
    %113 = arith.addf %70, %32 : vector<4x32xf32>
    %c24 = arith.constant 24 : index
    %c0_71 = arith.constant 0 : index
    %114 = vector.load %arg27[%c24, %c0_71] : memref<28x32xf32, #tpu.memory_space<vmem>>, vector<4x32xf32>
    tpu.vector_store %arg27[%c24, %c0_71], %113 {strides = array<i32>} : memref<28x32xf32, #tpu.memory_space<vmem>>, vector<4x32xf32>,
    %c0_72 = arith.constant 0 : index
    %c0_73 = arith.constant 0 : index
    %115 = vector.load %arg27[%c0_72, %c0_73] : memref<28x32xf32, #tpu.memory_space<vmem>>, vector<28x32xf32>
    %c0_74 = arith.constant 0 : index
    %c0_75 = arith.constant 0 : index
    %116 = vector.load %arg22[%c0_74, %c0_75] : memref<32x64xf32, #tpu.memory_space<vmem>>, vector<32x64xf32>
    %cst_76 = arith.constant dense<0.000000e+00> : vector<28x64xf32>
    %117 = tpu.matmul %115, %116, %cst_76 {dimension_numbers = #tpu.dot_dimension_numbers<[1], [0], [0], [1], [0, 0, 1, 1], [], []>} : vector<28x32xf32>, vector<32x64xf32>, vector<28x64xf32> -> vector<28x64xf32>
    %c0_77 = arith.constant 0 : index
    %c0_78 = arith.constant 0 : index
    %118 = vector.load %arg23[%c0_77, %c0_78] : memref<1x64xf32, #tpu.memory_space<vmem>>, vector<1x64xf32>
    %119 = vector.broadcast %118 : vector<1x64xf32> to vector<28x64xf32>
    %120 = arith.addf %117, %119 : vector<28x64xf32>
    %cst_79 = arith.constant 5.000000e-01 : f32
    %121 = vector.broadcast %cst_79 : f32 to vector<28x64xf32>
    %122 = arith.mulf %121, %120 : vector<28x64xf32>
    %cst_80 = arith.constant 1.41421354 : f32
    %123 = vector.broadcast %cst_80 : f32 to vector<28x64xf32>
    %124 = arith.divf %120, %123 : vector<28x64xf32>
    %125 = math.erf %124 : vector<28x64xf32>
    %cst_81 = arith.constant 1.000000e+00 : f32
    %126 = vector.broadcast %cst_81 : f32 to vector<28x64xf32>
    %127 = arith.addf %126, %125 : vector<28x64xf32>
    %128 = arith.mulf %122, %127 : vector<28x64xf32>
    %c0_82 = arith.constant 0 : index
    %c0_83 = arith.constant 0 : index
    %129 = vector.load %arg24[%c0_82, %c0_83] : memref<64x32xf32, #tpu.memory_space<vmem>>, vector<64x32xf32>
    %cst_84 = arith.constant dense<0.000000e+00> : vector<28x32xf32>
    %130 = tpu.matmul %128, %129, %cst_84 {dimension_numbers = #tpu.dot_dimension_numbers<[1], [0], [0], [1], [0, 0, 1, 1], [], []>} : vector<28x64xf32>, vector<64x32xf32>, vector<28x32xf32> -> vector<28x32xf32>
    %c0_85 = arith.constant 0 : index
    %c0_86 = arith.constant 0 : index
    %131 = vector.load %arg25[%c0_85, %c0_86] : memref<1x32xf32, #tpu.memory_space<vmem>>, vector<1x32xf32>
    %132 = vector.broadcast %131 : vector<1x32xf32> to vector<28x32xf32>
    %133 = arith.addf %130, %132 : vector<28x32xf32>
    %134 = arith.addf %1, %133 : vector<28x32xf32>
    %c0_87 = arith.constant 0 : index
    %c0_88 = arith.constant 0 : index
    %c0_89 = arith.constant 0 : index
    %135 = vector.load %arg26[%c0_87, %c0_88, %c0_89] : memref<1x28x32xf32, #tpu.memory_space<vmem>>, vector<1x28x32xf32>
    %136 = vector.shape_cast %135 : vector<1x28x32xf32> to vector<28x32xf32>
    %137 = vector.shape_cast %134 : vector<28x32xf32> to vector<1x28x32xf32>
    tpu.vector_store %arg26[%c0_87, %c0_88, %c0_89], %137 {strides = array<i32>} : memref<1x28x32xf32, #tpu.memory_space<vmem>>, vector<1x28x32xf32>,
    return
  }
  func.func @transform_0(%arg0: i32) -> (i32, i32, i32) {
    %c0_i32 = arith.constant 0 : i32
    %c0_i32_0 = arith.constant 0 : i32
    %c0_i32_1 = arith.constant 0 : i32
    return %arg0, %c0_i32, %c0_i32_0 : i32, i32, i32
  }
  func.func @transform_1(%arg0: i32) -> (i32, i32) {
    %c0_i32 = arith.constant 0 : i32
    %c0_i32_0 = arith.constant 0 : i32
    %c0_i32_1 = arith.constant 0 : i32
    return %c0_i32, %c0_i32_0 : i32, i32
  }
  func.func @transform_2(%arg0: i32) -> (i32, i32) {
    %c0_i32 = arith.constant 0 : i32
    %c0_i32_0 = arith.constant 0 : i32
    %c0_i32_1 = arith.constant 0 : i32
    return %c0_i32, %c0_i32_0 : i32, i32
  }
  func.func @transform_3(%arg0: i32) -> (i32, i32) {
    %c0_i32 = arith.constant 0 : i32
    %c0_i32_0 = arith.constant 0 : i32
    %c0_i32_1 = arith.constant 0 : i32
    return %c0_i32, %c0_i32_0 : i32, i32
  }
  func.func @transform_4(%arg0: i32) -> (i32, i32) {
    %c0_i32 = arith.constant 0 : i32
    %c0_i32_0 = arith.constant 0 : i32
    %c0_i32_1 = arith.constant 0 : i32
    return %c0_i32, %c0_i32_0 : i32, i32
  }
  func.func @transform_5(%arg0: i32) -> (i32, i32) {
    %c0_i32 = arith.constant 0 : i32
    %c0_i32_0 = arith.constant 0 : i32
    %c0_i32_1 = arith.constant 0 : i32
    return %c0_i32, %c0_i32_0 : i32, i32
  }
  func.func @transform_6(%arg0: i32) -> (i32, i32) {
    %c0_i32 = arith.constant 0 : i32
    %c0_i32_0 = arith.constant 0 : i32
    %c0_i32_1 = arith.constant 0 : i32
    return %c0_i32, %c0_i32_0 : i32, i32
  }
  func.func @transform_7(%arg0: i32) -> (i32, i32) {
    %c0_i32 = arith.constant 0 : i32
    %c0_i32_0 = arith.constant 0 : i32
    %c0_i32_1 = arith.constant 0 : i32
    return %c0_i32, %c0_i32_0 : i32, i32
  }
  func.func @transform_8(%arg0: i32) -> (i32, i32) {
    %c0_i32 = arith.constant 0 : i32
    %c0_i32_0 = arith.constant 0 : i32
    %c0_i32_1 = arith.constant 0 : i32
    return %c0_i32, %c0_i32_0 : i32, i32
  }
  func.func @transform_9(%arg0: i32) -> (i32, i32) {
    %c0_i32 = arith.constant 0 : i32
    %c0_i32_0 = arith.constant 0 : i32
    %c0_i32_1 = arith.constant 0 : i32
    return %c0_i32, %c0_i32_0 : i32, i32
  }
  func.func @transform_10(%arg0: i32) -> (i32, i32) {
    %c0_i32 = arith.constant 0 : i32
    %c0_i32_0 = arith.constant 0 : i32
    %c0_i32_1 = arith.constant 0 : i32
    return %c0_i32, %c0_i32_0 : i32, i32
  }
  func.func @transform_11(%arg0: i32) -> (i32, i32) {
    %c0_i32 = arith.constant 0 : i32
    %c0_i32_0 = arith.constant 0 : i32
    %c0_i32_1 = arith.constant 0 : i32
    return %c0_i32, %c0_i32_0 : i32, i32
  }
  func.func @transform_12(%arg0: i32) -> (i32, i32) {
    %c0_i32 = arith.constant 0 : i32
    %c0_i32_0 = arith.constant 0 : i32
    %c0_i32_1 = arith.constant 0 : i32
    return %c0_i32, %c0_i32_0 : i32, i32
  }
  func.func @transform_13(%arg0: i32) -> (i32, i32) {
    %c0_i32 = arith.constant 0 : i32
    %c0_i32_0 = arith.constant 0 : i32
    %c0_i32_1 = arith.constant 0 : i32
    return %c0_i32, %c0_i32_0 : i32, i32
  }
  func.func @transform_14(%arg0: i32) -> (i32, i32) {
    %c0_i32 = arith.constant 0 : i32
    %c0_i32_0 = arith.constant 0 : i32
    %c0_i32_1 = arith.constant 0 : i32
    return %c0_i32, %c0_i32_0 : i32, i32
  }
  func.func @transform_15(%arg0: i32) -> (i32, i32) {
    %c0_i32 = arith.constant 0 : i32
    %c0_i32_0 = arith.constant 0 : i32
    %c0_i32_1 = arith.constant 0 : i32
    return %c0_i32, %c0_i32_0 : i32, i32
  }
  func.func @transform_16(%arg0: i32) -> (i32, i32) {
    %c0_i32 = arith.constant 0 : i32
    %c0_i32_0 = arith.constant 0 : i32
    %c0_i32_1 = arith.constant 0 : i32
    return %c0_i32, %c0_i32_0 : i32, i32
  }
  func.func @transform_17(%arg0: i32) -> (i32, i32) {
    %c0_i32 = arith.constant 0 : i32
    %c0_i32_0 = arith.constant 0 : i32
    %c0_i32_1 = arith.constant 0 : i32
    return %c0_i32, %c0_i32_0 : i32, i32
  }
  func.func @transform_18(%arg0: i32) -> (i32, i32) {
    %c0_i32 = arith.constant 0 : i32
    %c0_i32_0 = arith.constant 0 : i32
    %c0_i32_1 = arith.constant 0 : i32
    return %c0_i32, %c0_i32_0 : i32, i32
  }
  func.func @transform_19(%arg0: i32) -> (i32, i32) {
    %c0_i32 = arith.constant 0 : i32
    %c0_i32_0 = arith.constant 0 : i32
    %c0_i32_1 = arith.constant 0 : i32
    return %c0_i32, %c0_i32_0 : i32, i32
  }
  func.func @transform_20(%arg0: i32) -> (i32, i32) {
    %c0_i32 = arith.constant 0 : i32
    %c0_i32_0 = arith.constant 0 : i32
    %c0_i32_1 = arith.constant 0 : i32
    return %c0_i32, %c0_i32_0 : i32, i32
  }
  func.func @transform_21(%arg0: i32) -> (i32, i32) {
    %c0_i32 = arith.constant 0 : i32
    %c0_i32_0 = arith.constant 0 : i32
    %c0_i32_1 = arith.constant 0 : i32
    return %c0_i32, %c0_i32_0 : i32, i32
  }
  func.func @transform_22(%arg0: i32) -> (i32, i32) {
    %c0_i32 = arith.constant 0 : i32
    %c0_i32_0 = arith.constant 0 : i32
    %c0_i32_1 = arith.constant 0 : i32
    return %c0_i32, %c0_i32_0 : i32, i32
  }
  func.func @transform_23(%arg0: i32) -> (i32, i32) {
    %c0_i32 = arith.constant 0 : i32
    %c0_i32_0 = arith.constant 0 : i32
    %c0_i32_1 = arith.constant 0 : i32
    return %c0_i32, %c0_i32_0 : i32, i32
  }
  func.func @transform_24(%arg0: i32) -> (i32, i32) {
    %c0_i32 = arith.constant 0 : i32
    %c0_i32_0 = arith.constant 0 : i32
    %c0_i32_1 = arith.constant 0 : i32
    return %c0_i32, %c0_i32_0 : i32, i32
  }
  func.func @transform_25(%arg0: i32) -> (i32, i32, i32) {
    %c0_i32 = arith.constant 0 : i32
    %c0_i32_0 = arith.constant 0 : i32
    %c0_i32_1 = arith.constant 0 : i32
    return %arg0, %c0_i32, %c0_i32_0 : i32, i32, i32
  }
}

</mosaic_0001>

<llo_original>
// kernel: tpu_custom_call.1
$region0: #{tpu_custom_call.1}
  #allocation0 [shape = 'u32[]', space=smem, size = 0x4, offset = 0x4, fixed_abs, tag = 'smem constant byte address 0x4 - core index']
  #allocation1 [shape = 'u32[144,128]{1,0:T(1,128)}', space=vmem, size = 0x12000, scoped, tag = 'internal scratch']
  #allocation2 [shape = 'f32[28,32]{1,0:T(8,128)}', space=vmem, size = 0x4000, scoped, tag = 'scratch operand']
  %s0 = inlined_call_operand.vmem [shape: f32[2,28,32], index: 0, kind: input, shape index: {}]
  %s1 = inlined_call_operand.vmem [shape: f32[32,17], index: 1, kind: input, shape index: {}]
  %s2 = inlined_call_operand.vmem [shape: f32[32,17], index: 2, kind: input, shape index: {}]
  %s3 = inlined_call_operand.vmem [shape: f32[17,32], index: 3, kind: input, shape index: {}]
  %s4 = inlined_call_operand.vmem [shape: f32[17,32], index: 4, kind: input, shape index: {}]
  %s5 = inlined_call_operand.vmem [shape: f32[8,16], index: 5, kind: input, shape index: {}]
  %s6 = inlined_call_operand.vmem [shape: f32[8,1], index: 6, kind: input, shape index: {}]
  %s7 = inlined_call_operand.vmem [shape: f32[8,8], index: 7, kind: input, shape index: {}]
  %s8 = inlined_call_operand.vmem [shape: f32[8,1], index: 8, kind: input, shape index: {}]
  %s9 = inlined_call_operand.vmem [shape: f32[4,8], index: 9, kind: input, shape index: {}]
  %s10 = inlined_call_operand.vmem [shape: f32[4,1], index: 10, kind: input, shape index: {}]
  %s11 = inlined_call_operand.vmem [shape: f32[4,4], index: 11, kind: input, shape index: {}]
  %s12 = inlined_call_operand.vmem [shape: f32[4,1], index: 12, kind: input, shape index: {}]
  %s13 = inlined_call_operand.vmem [shape: f32[8,4], index: 13, kind: input, shape index: {}]
  %s14 = inlined_call_operand.vmem [shape: f32[8,1], index: 14, kind: input, shape index: {}]
  %s15 = inlined_call_operand.vmem [shape: f32[8,8], index: 15, kind: input, shape index: {}]
  %s16 = inlined_call_operand.vmem [shape: f32[8,1], index: 16, kind: input, shape index: {}]
  %s17 = inlined_call_operand.vmem [shape: f32[16,8], index: 17, kind: input, shape index: {}]
  %s18 = inlined_call_operand.vmem [shape: f32[16,1], index: 18, kind: input, shape index: {}]
  %s19 = inlined_call_operand.vmem [shape: f32[16,16], index: 19, kind: input, shape index: {}]
  %s20 = inlined_call_operand.vmem [shape: f32[16,1], index: 20, kind: input, shape index: {}]
  %s21 = inlined_call_operand.vmem [shape: f32[32,64], index: 21, kind: input, shape index: {}]
  %s22 = inlined_call_operand.vmem [shape: f32[1,64], index: 22, kind: input, shape index: {}]
  %s23 = inlined_call_operand.vmem [shape: f32[64,32], index: 23, kind: input, shape index: {}]
  %s24 = inlined_call_operand.vmem [shape: f32[1,32], index: 24, kind: input, shape index: {}]
  %s25 = inlined_call_operand.vmem [shape: f32[2,28,32], index: 25, kind: output, shape index: {}]
  %s26 = sld [smem:[#allocation0]]
  $region133: #{tpu_custom_call.1} parent=0
    _
  %s28 = ssub.s32 1, %s26
  %s29 = scalar_select 0, %s28, %s26
  loop: start=0, step=1, limit=4
  $region2: #{tpu_custom_call.1} parent=0 // loop_pre_header
    _
  $region3: #{tpu_custom_call.1} parent=0 // loop_header
    %s31 = sphi 0, %s35
    %p32 = scmp.ge.s32.totalorder %s31, 4
    %s41 = sphi 0, %s43
    %s44 = sphi 0, %s41
    %s45 = sphi 0, %s44
    %s61 = sphi 0, %s45
    %s65 = sphi 0, %s65
    %s67 = sphi 0, %s65
    %s68 = sphi 0, %s67
    %s82 = sphi 0, %s68
    %s86 = sphi 0, %s86
    %s88 = sphi 0, %s86
    %s89 = sphi 0, %s88
    %s103 = sphi 0, %s89
    %s107 = sphi 0, %s107
    %s109 = sphi 0, %s107
    %s110 = sphi 0, %s109
    %s124 = sphi 0, %s110
    %s128 = sphi 0, %s128
    %s130 = sphi 0, %s128
    %s131 = sphi 0, %s130
    %s145 = sphi 0, %s131
    %s149 = sphi 0, %s149
    %s151 = sphi 0, %s149
    %s152 = sphi 0, %s151
    %s166 = sphi 0, %s152
    %s170 = sphi 0, %s170
    %s172 = sphi 0, %s170
    %s173 = sphi 0, %s172
    %s187 = sphi 0, %s173
    %s191 = sphi 0, %s191
    %s193 = sphi 0, %s191
    %s194 = sphi 0, %s193
    %s208 = sphi 0, %s194
    %s212 = sphi 0, %s212
    %s214 = sphi 0, %s212
    %s215 = sphi 0, %s214
    %s229 = sphi 0, %s215
    %s233 = sphi 0, %s233
    %s235 = sphi 0, %s233
    %s236 = sphi 0, %s235
    %s250 = sphi 0, %s236
    %s254 = sphi 0, %s254
    %s256 = sphi 0, %s254
    %s257 = sphi 0, %s256
    %s271 = sphi 0, %s257
    %s275 = sphi 0, %s275
    %s277 = sphi 0, %s275
    %s278 = sphi 0, %s277
    %s292 = sphi 0, %s278
    %s296 = sphi 0, %s296
    %s298 = sphi 0, %s296
    %s299 = sphi 0, %s298
    %s313 = sphi 0, %s299
    %s317 = sphi 0, %s317
    %s319 = sphi 0, %s317
    %s320 = sphi 0, %s319
    %s334 = sphi 0, %s320
    %s338 = sphi 0, %s338
    %s340 = sphi 0, %s338
    %s341 = sphi 0, %s340
    %s355 = sphi 0, %s341
    %s359 = sphi 0, %s359
    %s361 = sphi 0, %s359
    %s362 = sphi 0, %s361
    %s376 = sphi 0, %s362
    %s380 = sphi 0, %s380
    %s382 = sphi 0, %s380
    %s383 = sphi 0, %s382
    %s397 = sphi 0, %s383
    %s401 = sphi 0, %s401
    %s403 = sphi 0, %s401
    %s404 = sphi 0, %s403
    %s418 = sphi 0, %s404
    %s422 = sphi 0, %s422
    %s424 = sphi 0, %s422
    %s425 = sphi 0, %s424
    %s439 = sphi 0, %s425
    %s443 = sphi 0, %s443
    %s445 = sphi 0, %s443
    %s446 = sphi 0, %s445
    %s460 = sphi 0, %s446
    %s464 = sphi 0, %s464
    %s466 = sphi 0, %s464
    %s467 = sphi 0, %s466
    %s481 = sphi 0, %s467
    %s485 = sphi 0, %s485
    %s487 = sphi 0, %s485
    %s488 = sphi 0, %s487
    %s502 = sphi 0, %s488
    %s506 = sphi 0, %s506
    %s508 = sphi 0, %s506
    %s509 = sphi 0, %s508
    %s523 = sphi 0, %s509
    %s527 = sphi 0, %s527
    %s529 = sphi 0, %s527
    %s530 = sphi 0, %s529
    %s544 = sphi 0, %s530
    %s548 = sphi 0, %s548
    %s550 = sphi 0, %s548
    %s551 = sphi 0, %s550
    %s565 = sphi 0, %s551
    %s571 = sphi 0, %s573
    %s574 = sphi 0, %s571
    %s575 = sphi 0, %s574
    %s591 = sphi 0, %s575
  $region4: #{tpu_custom_call.1} parent=0 // loop_header_branch
    %34 = sbr.rel (%p32) target = $region8
  $region5: #{tpu_custom_call.1} parent=0 // loop_body
    %s36 = ssub.s32 %s31, 1
    %s37 = ssub.s32 %s31, 2
    %s38 = sadd.s32 %s31, 1
    %s39 = ssub.s32 %s31, %s38
    %p40 = scmp.eq.s32.totalorder %s39, 0
    %s42 = sadd.s32 %s41, 1
    %s43 = scalar_select %p40, %s41, %s42
    %p46 = pneg %p40
    %p47 = scmp.eq.s32.totalorder %s31, 1
    %p48 = por %p46, %p47
    %p49 = scmp.ne.s32.totalorder %s41, %s44
    %p50 = scmp.eq.s32.totalorder %s31, 0
    %p51 = por %p49, %p50
    %p52 = scmp.ne.s32.totalorder %s41, %s44
    %p53 = scmp.eq.s32.totalorder %s36, 1
    %p54 = por %p52, %p53
    %p55 = scmp.ne.s32.totalorder %s44, %s45
    %p56 = scmp.eq.s32.totalorder %s36, 0
    %p57 = por %p55, %p56
    %p58 = scmp.ne.s32.totalorder %s44, %s45
    %p59 = scmp.eq.s32.totalorder %s37, 1
    %p60 = por %p58, %p59
    %p62 = scmp.ne.s32.totalorder %s45, %s61
    %p63 = scmp.eq.s32.totalorder %s37, 0
    %p64 = por %p62, %p63
    %s66 = sadd.s32 %s65, 1
    %p69 = scmp.eq.s32.totalorder %s31, 1
    %p70 = scmp.ne.s32.totalorder %s65, %s67
    %p71 = scmp.eq.s32.totalorder %s31, 0
    %p72 = por %p70, %p71
    %p73 = scmp.ne.s32.totalorder %s65, %s67
    %p74 = scmp.eq.s32.totalorder %s36, 1
    %p75 = por %p73, %p74
    %p76 = scmp.ne.s32.totalorder %s67, %s68
    %p77 = scmp.eq.s32.totalorder %s36, 0
    %p78 = por %p76, %p77
    %p79 = scmp.ne.s32.totalorder %s67, %s68
    %p80 = scmp.eq.s32.totalorder %s37, 1
    %p81 = por %p79, %p80
    %p83 = scmp.ne.s32.totalorder %s68, %s82
    %p84 = scmp.eq.s32.totalorder %s37, 0
    %p85 = por %p83, %p84
    %s87 = sadd.s32 %s86, 1
    %p90 = scmp.eq.s32.totalorder %s31, 1
    %p91 = scmp.ne.s32.totalorder %s86, %s88
    %p92 = scmp.eq.s32.totalorder %s31, 0
    %p93 = por %p91, %p92
    %p94 = scmp.ne.s32.totalorder %s86, %s88
    %p95 = scmp.eq.s32.totalorder %s36, 1
    %p96 = por %p94, %p95
    %p97 = scmp.ne.s32.totalorder %s88, %s89
    %p98 = scmp.eq.s32.totalorder %s36, 0
    %p99 = por %p97, %p98
    %p100 = scmp.ne.s32.totalorder %s88, %s89
    %p101 = scmp.eq.s32.totalorder %s37, 1
    %p102 = por %p100, %p101
    %p104 = scmp.ne.s32.totalorder %s89, %s103
    %p105 = scmp.eq.s32.totalorder %s37, 0
    %p106 = por %p104, %p105
    %s108 = sadd.s32 %s107, 1
    %p111 = scmp.eq.s32.totalorder %s31, 1
    %p112 = scmp.ne.s32.totalorder %s107, %s109
    %p113 = scmp.eq.s32.totalorder %s31, 0
    %p114 = por %p112, %p113
    %p115 = scmp.ne.s32.totalorder %s107, %s109
    %p116 = scmp.eq.s32.totalorder %s36, 1
    %p117 = por %p115, %p116
    %p118 = scmp.ne.s32.totalorder %s109, %s110
    %p119 = scmp.eq.s32.totalorder %s36, 0
    %p120 = por %p118, %p119
    %p121 = scmp.ne.s32.totalorder %s109, %s110
    %p122 = scmp.eq.s32.totalorder %s37, 1
    %p123 = por %p121, %p122
    %p125 = scmp.ne.s32.totalorder %s110, %s124
    %p126 = scmp.eq.s32.totalorder %s37, 0
    %p127 = por %p125, %p126
    %s129 = sadd.s32 %s128, 1
    %p132 = scmp.eq.s32.totalorder %s31, 1
    %p133 = scmp.ne.s32.totalorder %s128, %s130
    %p134 = scmp.eq.s32.totalorder %s31, 0
    %p135 = por %p133, %p134
    %p136 = scmp.ne.s32.totalorder %s128, %s130
    %p137 = scmp.eq.s32.totalorder %s36, 1
    %p138 = por %p136, %p137
    %p139 = scmp.ne.s32.totalorder %s130, %s131
    %p140 = scmp.eq.s32.totalorder %s36, 0
    %p141 = por %p139, %p140
    %p142 = scmp.ne.s32.totalorder %s130, %s131
    %p143 = scmp.eq.s32.totalorder %s37, 1
    %p144 = por %p142, %p143
    %p146 = scmp.ne.s32.totalorder %s131, %s145
    %p147 = scmp.eq.s32.totalorder %s37, 0
    %p148 = por %p146, %p147
    %s150 = sadd.s32 %s149, 1
    %p153 = scmp.eq.s32.totalorder %s31, 1
    %p154 = scmp.ne.s32.totalorder %s149, %s151
    %p155 = scmp.eq.s32.totalorder %s31, 0
    %p156 = por %p154, %p155
    %p157 = scmp.ne.s32.totalorder %s149, %s151
    %p158 = scmp.eq.s32.totalorder %s36, 1
    %p159 = por %p157, %p158
    %p160 = scmp.ne.s32.totalorder %s151, %s152
    %p161 = scmp.eq.s32.totalorder %s36, 0
    %p162 = por %p160, %p161
    %p163 = scmp.ne.s32.totalorder %s151, %s152
    %p164 = scmp.eq.s32.totalorder %s37, 1
    %p165 = por %p163, %p164
    %p167 = scmp.ne.s32.totalorder %s152, %s166
    %p168 = scmp.eq.s32.totalorder %s37, 0
    %p169 = por %p167, %p168
    %s171 = sadd.s32 %s170, 1
    %p174 = scmp.eq.s32.totalorder %s31, 1
    %p175 = scmp.ne.s32.totalorder %s170, %s172
    %p176 = scmp.eq.s32.totalorder %s31, 0
    %p177 = por %p175, %p176
    %p178 = scmp.ne.s32.totalorder %s170, %s172
    %p179 = scmp.eq.s32.totalorder %s36, 1
    %p180 = por %p178, %p179
    %p181 = scmp.ne.s32.totalorder %s172, %s173
    %p182 = scmp.eq.s32.totalorder %s36, 0
    %p183 = por %p181, %p182
    %p184 = scmp.ne.s32.totalorder %s172, %s173
    %p185 = scmp.eq.s32.totalorder %s37, 1
    %p186 = por %p184, %p185
    %p188 = scmp.ne.s32.totalorder %s173, %s187
    %p189 = scmp.eq.s32.totalorder %s37, 0
    %p190 = por %p188, %p189
    %s192 = sadd.s32 %s191, 1
    %p195 = scmp.eq.s32.totalorder %s31, 1
    %p196 = scmp.ne.s32.totalorder %s191, %s193
    %p197 = scmp.eq.s32.totalorder %s31, 0
    %p198 = por %p196, %p197
    %p199 = scmp.ne.s32.totalorder %s191, %s193
    %p200 = scmp.eq.s32.totalorder %s36, 1
    %p201 = por %p199, %p200
    %p202 = scmp.ne.s32.totalorder %s193, %s194
    %p203 = scmp.eq.s32.totalorder %s36, 0
    %p204 = por %p202, %p203
    %p205 = scmp.ne.s32.totalorder %s193, %s194
    %p206 = scmp.eq.s32.totalorder %s37, 1
    %p207 = por %p205, %p206
    %p209 = scmp.ne.s32.totalorder %s194, %s208
    %p210 = scmp.eq.s32.totalorder %s37, 0
    %p211 = por %p209, %p210
    %s213 = sadd.s32 %s212, 1
    %p216 = scmp.eq.s32.totalorder %s31, 1
    %p217 = scmp.ne.s32.totalorder %s212, %s214
    %p218 = scmp.eq.s32.totalorder %s31, 0
    %p219 = por %p217, %p218
    %p220 = scmp.ne.s32.totalorder %s212, %s214
    %p221 = scmp.eq.s32.totalorder %s36, 1
    %p222 = por %p220, %p221
    %p223 = scmp.ne.s32.totalorder %s214, %s215
    %p224 = scmp.eq.s32.totalorder %s36, 0
    %p225 = por %p223, %p224
    %p226 = scmp.ne.s32.totalorder %s214, %s215
    %p227 = scmp.eq.s32.totalorder %s37, 1
    %p228 = por %p226, %p227
    %p230 = scmp.ne.s32.totalorder %s215, %s229
    %p231 = scmp.eq.s32.totalorder %s37, 0
    %p232 = por %p230, %p231
    %s234 = sadd.s32 %s233, 1
    %p237 = scmp.eq.s32.totalorder %s31, 1
    %p238 = scmp.ne.s32.totalorder %s233, %s235
    %p239 = scmp.eq.s32.totalorder %s31, 0
    %p240 = por %p238, %p239
    %p241 = scmp.ne.s32.totalorder %s233, %s235
    %p242 = scmp.eq.s32.totalorder %s36, 1
    %p243 = por %p241, %p242
    %p244 = scmp.ne.s32.totalorder %s235, %s236
    %p245 = scmp.eq.s32.totalorder %s36, 0
    %p246 = por %p244, %p245
    %p247 = scmp.ne.s32.totalorder %s235, %s236
    %p248 = scmp.eq.s32.totalorder %s37, 1
    %p249 = por %p247, %p248
    %p251 = scmp.ne.s32.totalorder %s236, %s250
    %p252 = scmp.eq.s32.totalorder %s37, 0
    %p253 = por %p251, %p252
    %s255 = sadd.s32 %s254, 1
    %p258 = scmp.eq.s32.totalorder %s31, 1
    %p259 = scmp.ne.s32.totalorder %s254, %s256
    %p260 = scmp.eq.s32.totalorder %s31, 0
    %p261 = por %p259, %p260
    %p262 = scmp.ne.s32.totalorder %s254, %s256
    %p263 = scmp.eq.s32.totalorder %s36, 1
    %p264 = por %p262, %p263
    %p265 = scmp.ne.s32.totalorder %s256, %s257
    %p266 = scmp.eq.s32.totalorder %s36, 0
    %p267 = por %p265, %p266
    %p268 = scmp.ne.s32.totalorder %s256, %s257
    %p269 = scmp.eq.s32.totalorder %s37, 1
    %p270 = por %p268, %p269
    %p272 = scmp.ne.s32.totalorder %s257, %s271
    %p273 = scmp.eq.s32.totalorder %s37, 0
    %p274 = por %p272, %p273
    %s276 = sadd.s32 %s275, 1
    %p279 = scmp.eq.s32.totalorder %s31, 1
    %p280 = scmp.ne.s32.totalorder %s275, %s277
    %p281 = scmp.eq.s32.totalorder %s31, 0
    %p282 = por %p280, %p281
    %p283 = scmp.ne.s32.totalorder %s275, %s277
    %p284 = scmp.eq.s32.totalorder %s36, 1
    %p285 = por %p283, %p284
    %p286 = scmp.ne.s32.totalorder %s277, %s278
    %p287 = scmp.eq.s32.totalorder %s36, 0
    %p288 = por %p286, %p287
    %p289 = scmp.ne.s32.totalorder %s277, %s278
    %p290 = scmp.eq.s32.totalorder %s37, 1
    %p291 = por %p289, %p290
    %p293 = scmp.ne.s32.totalorder %s278, %s292
    %p294 = scmp.eq.s32.totalorder %s37, 0
    %p295 = por %p293, %p294
    %s297 = sadd.s32 %s296, 1
    %p300 = scmp.eq.s32.totalorder %s31, 1
    %p301 = scmp.ne.s32.totalorder %s296, %s298
    %p302 = scmp.eq.s32.totalorder %s31, 0
    %p303 = por %p301, %p302
    %p304 = scmp.ne.s32.totalorder %s296, %s298
    %p305 = scmp.eq.s32.totalorder %s36, 1
    %p306 = por %p304, %p305
    %p307 = scmp.ne.s32.totalorder %s298, %s299
    %p308 = scmp.eq.s32.totalorder %s36, 0
    %p309 = por %p307, %p308
    %p310 = scmp.ne.s32.totalorder %s298, %s299
    %p311 = scmp.eq.s32.totalorder %s37, 1
    %p312 = por %p310, %p311
    %p314 = scmp.ne.s32.totalorder %s299, %s313
    %p315 = scmp.eq.s32.totalorder %s37, 0
    %p316 = por %p314, %p315
    %s318 = sadd.s32 %s317, 1
    %p321 = scmp.eq.s32.totalorder %s31, 1
    %p322 = scmp.ne.s32.totalorder %s317, %s319
    %p323 = scmp.eq.s32.totalorder %s31, 0
    %p324 = por %p322, %p323
    %p325 = scmp.ne.s32.totalorder %s317, %s319
    %p326 = scmp.eq.s32.totalorder %s36, 1
    %p327 = por %p325, %p326
    %p328 = scmp.ne.s32.totalorder %s319, %s320
    %p329 = scmp.eq.s32.totalorder %s36, 0
    %p330 = por %p328, %p329
    %p331 = scmp.ne.s32.totalorder %s319, %s320
    %p332 = scmp.eq.s32.totalorder %s37, 1
    %p333 = por %p331, %p332
    %p335 = scmp.ne.s32.totalorder %s320, %s334
    %p336 = scmp.eq.s32.totalorder %s37, 0
    %p337 = por %p335, %p336
    %s339 = sadd.s32 %s338, 1
    %p342 = scmp.eq.s32.totalorder %s31, 1
    %p343 = scmp.ne.s32.totalorder %s338, %s340
    %p344 = scmp.eq.s32.totalorder %s31, 0
    %p345 = por %p343, %p344
    %p346 = scmp.ne.s32.totalorder %s338, %s340
    %p347 = scmp.eq.s32.totalorder %s36, 1
    %p348 = por %p346, %p347
    %p349 = scmp.ne.s32.totalorder %s340, %s341
    %p350 = scmp.eq.s32.totalorder %s36, 0
    %p351 = por %p349, %p350
    %p352 = scmp.ne.s32.totalorder %s340, %s341
    %p353 = scmp.eq.s32.totalorder %s37, 1
    %p354 = por %p352, %p353
    %p356 = scmp.ne.s32.totalorder %s341, %s355
    %p357 = scmp.eq.s32.totalorder %s37, 0
    %p358 = por %p356, %p357
    %s360 = sadd.s32 %s359, 1
    %p363 = scmp.eq.s32.totalorder %s31, 1
    %p364 = scmp.ne.s32.totalorder %s359, %s361
    %p365 = scmp.eq.s32.totalorder %s31, 0
    %p366 = por %p364, %p365
    %p367 = scmp.ne.s32.totalorder %s359, %s361
    %p368 = scmp.eq.s32.totalorder %s36, 1
    %p369 = por %p367, %p368
    %p370 = scmp.ne.s32.totalorder %s361, %s362
    %p371 = scmp.eq.s32.totalorder %s36, 0
    %p372 = por %p370, %p371
    %p373 = scmp.ne.s32.totalorder %s361, %s362
    %p374 = scmp.eq.s32.totalorder %s37, 1
    %p375 = por %p373, %p374
    %p377 = scmp.ne.s32.totalorder %s362, %s376
    %p378 = scmp.eq.s32.totalorder %s37, 0
    %p379 = por %p377, %p378
    %s381 = sadd.s32 %s380, 1
    %p384 = scmp.eq.s32.totalorder %s31, 1
    %p385 = scmp.ne.s32.totalorder %s380, %s382
    %p386 = scmp.eq.s32.totalorder %s31, 0
    %p387 = por %p385, %p386
    %p388 = scmp.ne.s32.totalorder %s380, %s382
    %p389 = scmp.eq.s32.totalorder %s36, 1
    %p390 = por %p388, %p389
    %p391 = scmp.ne.s32.totalorder %s382, %s383
    %p392 = scmp.eq.s32.totalorder %s36, 0
    %p393 = por %p391, %p392
    %p394 = scmp.ne.s32.totalorder %s382, %s383
    %p395 = scmp.eq.s32.totalorder %s37, 1
    %p396 = por %p394, %p395
    %p398 = scmp.ne.s32.totalorder %s383, %s397
    %p399 = scmp.eq.s32.totalorder %s37, 0
    %p400 = por %p398, %p399
    %s402 = sadd.s32 %s401, 1
    %p405 = scmp.eq.s32.totalorder %s31, 1
    %p406 = scmp.ne.s32.totalorder %s401, %s403
    %p407 = scmp.eq.s32.totalorder %s31, 0
    %p408 = por %p406, %p407
    %p409 = scmp.ne.s32.totalorder %s401, %s403
    %p410 = scmp.eq.s32.totalorder %s36, 1
    %p411 = por %p409, %p410
    %p412 = scmp.ne.s32.totalorder %s403, %s404
    %p413 = scmp.eq.s32.totalorder %s36, 0
    %p414 = por %p412, %p413
    %p415 = scmp.ne.s32.totalorder %s403, %s404
    %p416 = scmp.eq.s32.totalorder %s37, 1
    %p417 = por %p415, %p416
    %p419 = scmp.ne.s32.totalorder %s404, %s418
    %p420 = scmp.eq.s32.totalorder %s37, 0
    %p421 = por %p419, %p420
    %s423 = sadd.s32 %s422, 1
    %p426 = scmp.eq.s32.totalorder %s31, 1
    %p427 = scmp.ne.s32.totalorder %s422, %s424
    %p428 = scmp.eq.s32.totalorder %s31, 0
    %p429 = por %p427, %p428
    %p430 = scmp.ne.s32.totalorder %s422, %s424
    %p431 = scmp.eq.s32.totalorder %s36, 1
    %p432 = por %p430, %p431
    %p433 = scmp.ne.s32.totalorder %s424, %s425
    %p434 = scmp.eq.s32.totalorder %s36, 0
    %p435 = por %p433, %p434
    %p436 = scmp.ne.s32.totalorder %s424, %s425
    %p437 = scmp.eq.s32.totalorder %s37, 1
    %p438 = por %p436, %p437
    %p440 = scmp.ne.s32.totalorder %s425, %s439
    %p441 = scmp.eq.s32.totalorder %s37, 0
    %p442 = por %p440, %p441
    %s444 = sadd.s32 %s443, 1
    %p447 = scmp.eq.s32.totalorder %s31, 1
    %p448 = scmp.ne.s32.totalorder %s443, %s445
    %p449 = scmp.eq.s32.totalorder %s31, 0
    %p450 = por %p448, %p449
    %p451 = scmp.ne.s32.totalorder %s443, %s445
    %p452 = scmp.eq.s32.totalorder %s36, 1
    %p453 = por %p451, %p452
    %p454 = scmp.ne.s32.totalorder %s445, %s446
    %p455 = scmp.eq.s32.totalorder %s36, 0
    %p456 = por %p454, %p455
    %p457 = scmp.ne.s32.totalorder %s445, %s446
    %p458 = scmp.eq.s32.totalorder %s37, 1
    %p459 = por %p457, %p458
    %p461 = scmp.ne.s32.totalorder %s446, %s460
    %p462 = scmp.eq.s32.totalorder %s37, 0
    %p463 = por %p461, %p462
    %s465 = sadd.s32 %s464, 1
    %p468 = scmp.eq.s32.totalorder %s31, 1
    %p469 = scmp.ne.s32.totalorder %s464, %s466
    %p470 = scmp.eq.s32.totalorder %s31, 0
    %p471 = por %p469, %p470
    %p472 = scmp.ne.s32.totalorder %s464, %s466
    %p473 = scmp.eq.s32.totalorder %s36, 1
    %p474 = por %p472, %p473
    %p475 = scmp.ne.s32.totalorder %s466, %s467
    %p476 = scmp.eq.s32.totalorder %s36, 0
    %p477 = por %p475, %p476
    %p478 = scmp.ne.s32.totalorder %s466, %s467
    %p479 = scmp.eq.s32.totalorder %s37, 1
    %p480 = por %p478, %p479
    %p482 = scmp.ne.s32.totalorder %s467, %s481
    %p483 = scmp.eq.s32.totalorder %s37, 0
    %p484 = por %p482, %p483
    %s486 = sadd.s32 %s485, 1
    %p489 = scmp.eq.s32.totalorder %s31, 1
    %p490 = scmp.ne.s32.totalorder %s485, %s487
    %p491 = scmp.eq.s32.totalorder %s31, 0
    %p492 = por %p490, %p491
    %p493 = scmp.ne.s32.totalorder %s485, %s487
    %p494 = scmp.eq.s32.totalorder %s36, 1
    %p495 = por %p493, %p494
    %p496 = scmp.ne.s32.totalorder %s487, %s488
    %p497 = scmp.eq.s32.totalorder %s36, 0
    %p498 = por %p496, %p497
    %p499 = scmp.ne.s32.totalorder %s487, %s488
    %p500 = scmp.eq.s32.totalorder %s37, 1
    %p501 = por %p499, %p500
    %p503 = scmp.ne.s32.totalorder %s488, %s502
    %p504 = scmp.eq.s32.totalorder %s37, 0
    %p505 = por %p503, %p504
    %s507 = sadd.s32 %s506, 1
    %p510 = scmp.eq.s32.totalorder %s31, 1
    %p511 = scmp.ne.s32.totalorder %s506, %s508
    %p512 = scmp.eq.s32.totalorder %s31, 0
    %p513 = por %p511, %p512
    %p514 = scmp.ne.s32.totalorder %s506, %s508
    %p515 = scmp.eq.s32.totalorder %s36, 1
    %p516 = por %p514, %p515
    %p517 = scmp.ne.s32.totalorder %s508, %s509
    %p518 = scmp.eq.s32.totalorder %s36, 0
    %p519 = por %p517, %p518
    %p520 = scmp.ne.s32.totalorder %s508, %s509
    %p521 = scmp.eq.s32.totalorder %s37, 1
    %p522 = por %p520, %p521
    %p524 = scmp.ne.s32.totalorder %s509, %s523
    %p525 = scmp.eq.s32.totalorder %s37, 0
    %p526 = por %p524, %p525
    %s528 = sadd.s32 %s527, 1
    %p531 = scmp.eq.s32.totalorder %s31, 1
    %p532 = scmp.ne.s32.totalorder %s527, %s529
    %p533 = scmp.eq.s32.totalorder %s31, 0
    %p534 = por %p532, %p533
    %p535 = scmp.ne.s32.totalorder %s527, %s529
    %p536 = scmp.eq.s32.totalorder %s36, 1
    %p537 = por %p535, %p536
    %p538 = scmp.ne.s32.totalorder %s529, %s530
    %p539 = scmp.eq.s32.totalorder %s36, 0
    %p540 = por %p538, %p539
    %p541 = scmp.ne.s32.totalorder %s529, %s530
    %p542 = scmp.eq.s32.totalorder %s37, 1
    %p543 = por %p541, %p542
    %p545 = scmp.ne.s32.totalorder %s530, %s544
    %p546 = scmp.eq.s32.totalorder %s37, 0
    %p547 = por %p545, %p546
    %s549 = sadd.s32 %s548, 1
    %p552 = scmp.eq.s32.totalorder %s31, 1
    %p553 = scmp.ne.s32.totalorder %s548, %s550
    %p554 = scmp.eq.s32.totalorder %s31, 0
    %p555 = por %p553, %p554
    %p556 = scmp.ne.s32.totalorder %s548, %s550
    %p557 = scmp.eq.s32.totalorder %s36, 1
    %p558 = por %p556, %p557
    %p559 = scmp.ne.s32.totalorder %s550, %s551
    %p560 = scmp.eq.s32.totalorder %s36, 0
    %p561 = por %p559, %p560
    %p562 = scmp.ne.s32.totalorder %s550, %s551
    %p563 = scmp.eq.s32.totalorder %s37, 1
    %p564 = por %p562, %p563
    %p566 = scmp.ne.s32.totalorder %s551, %s565
    %p567 = scmp.eq.s32.totalorder %s37, 0
    %p568 = por %p566, %p567
    %s569 = ssub.s32 %s31, %s38
    %p570 = scmp.eq.s32.totalorder %s569, 0
    %s572 = sadd.s32 %s571, 1
    %s573 = scalar_select %p570, %s571, %s572
    %p576 = pneg %p570
    %p577 = scmp.eq.s32.totalorder %s31, 1
    %p578 = por %p576, %p577
    %p579 = scmp.ne.s32.totalorder %s571, %s574
    %p580 = scmp.eq.s32.totalorder %s31, 0
    %p581 = por %p579, %p580
    %p582 = scmp.ne.s32.totalorder %s571, %s574
    %p583 = scmp.eq.s32.totalorder %s36, 1
    %p584 = por %p582, %p583
    %p585 = scmp.ne.s32.totalorder %s574, %s575
    %p586 = scmp.eq.s32.totalorder %s36, 0
    %p587 = por %p585, %p586
    %p588 = scmp.ne.s32.totalorder %s574, %s575
    %p589 = scmp.eq.s32.totalorder %s37, 1
    %p590 = por %p588, %p589
    %p592 = scmp.ne.s32.totalorder %s575, %s591
    %p593 = scmp.eq.s32.totalorder %s37, 0
    %p594 = por %p592, %p593
    %p595 = scmp.le.s32.totalorder 1, %s31
    %p596 = scmp.lt.s32.totalorder %s31, 3
    %p597 = pnand %p595, %p596
    %p598 = pneg %p597
    // Predicated region
    $region9: #{tpu_custom_call.1} parent=5 // pred_check
      _
    $region10: #{tpu_custom_call.1} parent=5 // pred_check_branch
      %600 = sbr.rel (%p597) target = $region12
    $region11: #{tpu_custom_call.1} parent=5 // pred_region
      %s601 = ssub.s32 %s31, 1
      // Predicated region
      $region13: #{tpu_custom_call.1} parent=11 // pred_check
        %p602 = pneg %p78
      $region14: #{tpu_custom_call.1} parent=11 // pred_check_branch
        %604 = sbr.rel (%p602) target = $region16
      $region15: #{tpu_custom_call.1} parent=11 // pred_region
        _
      $region16: #{tpu_custom_call.1} parent=11 // pred_fallthru
        _
      // Predicated region
      $region17: #{tpu_custom_call.1} parent=11 // pred_check
        %p605 = pneg %p99
      $region18: #{tpu_custom_call.1} parent=11 // pred_check_branch
        %607 = sbr.rel (%p605) target = $region20
      $region19: #{tpu_custom_call.1} parent=11 // pred_region
        _
      $region20: #{tpu_custom_call.1} parent=11 // pred_fallthru
        _
      // Predicated region
      $region21: #{tpu_custom_call.1} parent=11 // pred_check
        %p608 = pneg %p120
      $region22: #{tpu_custom_call.1} parent=11 // pred_check_branch
        %610 = sbr.rel (%p608) target = $region24
      $region23: #{tpu_custom_call.1} parent=11 // pred_region
        _
      $region24: #{tpu_custom_call.1} parent=11 // pred_fallthru
        _
      // Predicated region
      $region25: #{tpu_custom_call.1} parent=11 // pred_check
        %p611 = pneg %p141
      $region26: #{tpu_custom_call.1} parent=11 // pred_check_branch
        %613 = sbr.rel (%p611) target = $region28
      $region27: #{tpu_custom_call.1} parent=11 // pred_region
        _
      $region28: #{tpu_custom_call.1} parent=11 // pred_fallthru
        _
      // Predicated region
      $region29: #{tpu_custom_call.1} parent=11 // pred_check
        %p614 = pneg %p162
      $region30: #{tpu_custom_call.1} parent=11 // pred_check_branch
        %616 = sbr.rel (%p614) target = $region32
      $region31: #{tpu_custom_call.1} parent=11 // pred_region
        _
      $region32: #{tpu_custom_call.1} parent=11 // pred_fallthru
        _
      // Predicated region
      $region33: #{tpu_custom_call.1} parent=11 // pred_check
        %p617 = pneg %p183
      $region34: #{tpu_custom_call.1} parent=11 // pred_check_branch
        %619 = sbr.rel (%p617) target = $region36
      $region35: #{tpu_custom_call.1} parent=11 // pred_region
        _
      $region36: #{tpu_custom_call.1} parent=11 // pred_fallthru
        _
      // Predicated region
      $region37: #{tpu_custom_call.1} parent=11 // pred_check
        %p620 = pneg %p204
      $region38: #{tpu_custom_call.1} parent=11 // pred_check_branch
        %622 = sbr.rel (%p620) target = $region40
      $region39: #{tpu_custom_call.1} parent=11 // pred_region
        _
      $region40: #{tpu_custom_call.1} parent=11 // pred_fallthru
        _
      // Predicated region
      $region41: #{tpu_custom_call.1} parent=11 // pred_check
        %p623 = pneg %p225
      $region42: #{tpu_custom_call.1} parent=11 // pred_check_branch
        %625 = sbr.rel (%p623) target = $region44
      $region43: #{tpu_custom_call.1} parent=11 // pred_region
        _
      $region44: #{tpu_custom_call.1} parent=11 // pred_fallthru
        _
      // Predicated region
      $region45: #{tpu_custom_call.1} parent=11 // pred_check
        %p626 = pneg %p246
      $region46: #{tpu_custom_call.1} parent=11 // pred_check_branch
        %628 = sbr.rel (%p626) target = $region48
      $region47: #{tpu_custom_call.1} parent=11 // pred_region
        _
      $region48: #{tpu_custom_call.1} parent=11 // pred_fallthru
        _
      // Predicated region
      $region49: #{tpu_custom_call.1} parent=11 // pred_check
        %p629 = pneg %p267
      $region50: #{tpu_custom_call.1} parent=11 // pred_check_branch
        %631 = sbr.rel (%p629) target = $region52
      $region51: #{tpu_custom_call.1} parent=11 // pred_region
        _
      $region52: #{tpu_custom_call.1} parent=11 // pred_fallthru
        _
      // Predicated region
      $region53: #{tpu_custom_call.1} parent=11 // pred_check
        %p632 = pneg %p288
      $region54: #{tpu_custom_call.1} parent=11 // pred_check_branch
        %634 = sbr.rel (%p632) target = $region56
      $region55: #{tpu_custom_call.1} parent=11 // pred_region
        _
      $region56: #{tpu_custom_call.1} parent=11 // pred_fallthru
        _
      // Predicated region
      $region57: #{tpu_custom_call.1} parent=11 // pred_check
        %p635 = pneg %p309
      $region58: #{tpu_custom_call.1} parent=11 // pred_check_branch
        %637 = sbr.rel (%p635) target = $region60
      $region59: #{tpu_custom_call.1} parent=11 // pred_region
        _
      $region60: #{tpu_custom_call.1} parent=11 // pred_fallthru
        _
      // Predicated region
      $region61: #{tpu_custom_call.1} parent=11 // pred_check
        %p638 = pneg %p330
      $region62: #{tpu_custom_call.1} parent=11 // pred_check_branch
        %640 = sbr.rel (%p638) target = $region64
      $region63: #{tpu_custom_call.1} parent=11 // pred_region
        _
      $region64: #{tpu_custom_call.1} parent=11 // pred_fallthru
        _
      // Predicated region
      $region65: #{tpu_custom_call.1} parent=11 // pred_check
        %p641 = pneg %p351
      $region66: #{tpu_custom_call.1} parent=11 // pred_check_branch
        %643 = sbr.rel (%p641) target = $region68
      $region67: #{tpu_custom_call.1} parent=11 // pred_region
        _
      $region68: #{tpu_custom_call.1} parent=11 // pred_fallthru
        _
      // Predicated region
      $region69: #{tpu_custom_call.1} parent=11 // pred_check
        %p644 = pneg %p372
      $region70: #{tpu_custom_call.1} parent=11 // pred_check_branch
        %646 = sbr.rel (%p644) target = $region72
      $region71: #{tpu_custom_call.1} parent=11 // pred_region
        _
      $region72: #{tpu_custom_call.1} parent=11 // pred_fallthru
        _
      // Predicated region
      $region73: #{tpu_custom_call.1} parent=11 // pred_check
        %p647 = pneg %p393
      $region74: #{tpu_custom_call.1} parent=11 // pred_check_branch
        %649 = sbr.rel (%p647) target = $region76
      $region75: #{tpu_custom_call.1} parent=11 // pred_region
        _
      $region76: #{tpu_custom_call.1} parent=11 // pred_fallthru
        _
      // Predicated region
      $region77: #{tpu_custom_call.1} parent=11 // pred_check
        %p650 = pneg %p414
      $region78: #{tpu_custom_call.1} parent=11 // pred_check_branch
        %652 = sbr.rel (%p650) target = $region80
      $region79: #{tpu_custom_call.1} parent=11 // pred_region
        _
      $region80: #{tpu_custom_call.1} parent=11 // pred_fallthru
        _
      // Predicated region
      $region81: #{tpu_custom_call.1} parent=11 // pred_check
        %p653 = pneg %p435
      $region82: #{tpu_custom_call.1} parent=11 // pred_check_branch
        %655 = sbr.rel (%p653) target = $region84
      $region83: #{tpu_custom_call.1} parent=11 // pred_region
        _
      $region84: #{tpu_custom_call.1} parent=11 // pred_fallthru
        _
      // Predicated region
      $region85: #{tpu_custom_call.1} parent=11 // pred_check
        %p656 = pneg %p456
      $region86: #{tpu_custom_call.1} parent=11 // pred_check_branch
        %658 = sbr.rel (%p656) target = $region88
      $region87: #{tpu_custom_call.1} parent=11 // pred_region
        _
      $region88: #{tpu_custom_call.1} parent=11 // pred_fallthru
        _
      // Predicated region
      $region89: #{tpu_custom_call.1} parent=11 // pred_check
        %p659 = pneg %p477
      $region90: #{tpu_custom_call.1} parent=11 // pred_check_branch
        %661 = sbr.rel (%p659) target = $region92
      $region91: #{tpu_custom_call.1} parent=11 // pred_region
        _
      $region92: #{tpu_custom_call.1} parent=11 // pred_fallthru
        _
      // Predicated region
      $region93: #{tpu_custom_call.1} parent=11 // pred_check
        %p662 = pneg %p498
      $region94: #{tpu_custom_call.1} parent=11 // pred_check_branch
        %664 = sbr.rel (%p662) target = $region96
      $region95: #{tpu_custom_call.1} parent=11 // pred_region
        _
      $region96: #{tpu_custom_call.1} parent=11 // pred_fallthru
        _
      // Predicated region
      $region97: #{tpu_custom_call.1} parent=11 // pred_check
        %p665 = pneg %p519
      $region98: #{tpu_custom_call.1} parent=11 // pred_check_branch
        %667 = sbr.rel (%p665) target = $region100
      $region99: #{tpu_custom_call.1} parent=11 // pred_region
        _
      $region100: #{tpu_custom_call.1} parent=11 // pred_fallthru
        _
      // Predicated region
      $region101: #{tpu_custom_call.1} parent=11 // pred_check
        %p668 = pneg %p540
      $region102: #{tpu_custom_call.1} parent=11 // pred_check_branch
        %670 = sbr.rel (%p668) target = $region104
      $region103: #{tpu_custom_call.1} parent=11 // pred_region
        _
      $region104: #{tpu_custom_call.1} parent=11 // pred_fallthru
        _
      // Predicated region
      $region105: #{tpu_custom_call.1} parent=11 // pred_check
        %p671 = pneg %p561
      $region106: #{tpu_custom_call.1} parent=11 // pred_check_branch
        %673 = sbr.rel (%p671) target = $region108
      $region107: #{tpu_custom_call.1} parent=11 // pred_region
        _
      $region108: #{tpu_custom_call.1} parent=11 // pred_fallthru
        _
    $region12: #{tpu_custom_call.1} parent=5 // pred_fallthru
      _
    %p674 = scmp.lt.s32.totalorder %s31, 2
    // Predicated region
    $region109: #{tpu_custom_call.1} parent=5 // pred_check
      %p675 = pneg %p674
    $region110: #{tpu_custom_call.1} parent=5 // pred_check_branch
      %677 = sbr.rel (%p675) target = $region112
    $region111: #{tpu_custom_call.1} parent=5 // pred_region
      // Predicated region
      $region113: #{tpu_custom_call.1} parent=111 // pred_check
        %p678 = pneg %p51
      $region114: #{tpu_custom_call.1} parent=111 // pred_check_branch
        %680 = sbr.rel (%p678) target = $region116
      $region115: #{tpu_custom_call.1} parent=111 // pred_region
        %p681 = scmp.lt.s32.totalorder %s31, 1
        %s682 = scalar_select %p681, %s31, 1
        %s683 = smul.addr %s682, 4
        %s684 = smul.addr %s683, 8
        %s685 = scalar_lea.vmem %s0, %s684
      $region116: #{tpu_custom_call.1} parent=111 // pred_fallthru
        _
    $region112: #{tpu_custom_call.1} parent=5 // pred_fallthru
      _
    %p686 = scmp.le.s32.totalorder 1, %s31
    %p687 = scmp.lt.s32.totalorder %s31, 3
    %p688 = pnand %p686, %p687
    %p689 = pneg %p688
    // Predicated region
    $region117: #{tpu_custom_call.1} parent=5 // pred_check
      _
    $region118: #{tpu_custom_call.1} parent=5 // pred_check_branch
      %691 = sbr.rel (%p688) target = $region120
    $region119: #{tpu_custom_call.1} parent=5 // pred_region
      %s692 = ssub.s32 %s31, 1
      %p693 = scmp.lt.s32.totalorder %s36, 1
      %s694 = scalar_select %p693, %s36, 1
      %s695 = smul.addr %s694, 4
      %s696 = smul.addr %s695, 8
      %s697 = scalar_lea.vmem %s0, %s696
      %p698 = pneg %p57
      %p699 = pneg %p54
      %p700 = pneg %p78
      %p701 = pneg %p75
      %p702 = pneg %p99
      %p703 = pneg %p96
      %p704 = pneg %p120
      %p705 = pneg %p117
      %p706 = pneg %p141
      %p707 = pneg %p138
      %p708 = pneg %p162
      %p709 = pneg %p159
      %p710 = pneg %p183
      %p711 = pneg %p180
      %p712 = pneg %p204
      %p713 = pneg %p201
      %p714 = pneg %p225
      %p715 = pneg %p222
      %p716 = pneg %p246
      %p717 = pneg %p243
      %p718 = pneg %p267
      %p719 = pneg %p264
      %p720 = pneg %p288
      %p721 = pneg %p285
      %p722 = pneg %p309
      %p723 = pneg %p306
      %p724 = pneg %p330
      %p725 = pneg %p327
      %p726 = pneg %p351
      %p727 = pneg %p348
      %p728 = pneg %p372
      %p729 = pneg %p369
      %p730 = pneg %p393
      %p731 = pneg %p390
      %p732 = pneg %p414
      %p733 = pneg %p411
      %p734 = pneg %p435
      %p735 = pneg %p432
      %p736 = pneg %p456
      %p737 = pneg %p453
      %p738 = pneg %p477
      %p739 = pneg %p474
      %p740 = pneg %p498
      %p741 = pneg %p495
      %p742 = pneg %p519
      %p743 = pneg %p516
      %p744 = pneg %p540
      %p745 = pneg %p537
      %p746 = pneg %p561
      %p747 = pneg %p558
      %p748 = pneg %p587
      %p749 = pneg %p584
      %p750 = scmp.lt.s32.totalorder %s36, 1
      %s751 = scalar_select %p750, %s36, 1
      %s752 = smul.addr %s751, 4
      %s753 = smul.addr %s752, 8
      %s754 = scalar_lea.vmem %s25, %s753
      %p755 = scmp.lt.s32.totalorder %s36, 1
      %s756 = scalar_select %p755, %s36, 1
      %s757 = smul.addr %s756, 4
      %s758 = smul.addr %s757, 8
      %s759 = scalar_lea.vmem %s0, %s758
      %p760 = scmp.lt.s32.totalorder %s36, 1
      %s761 = scalar_select %p760, %s36, 1
      %s762 = smul.addr %s761, 4
      %s763 = smul.addr %s762, 8
      %s764 = scalar_lea.vmem %s25, %s763
      %v765 = vld [vmem:[%s759] sm:$0xff]
      %v766 = vld [vmem:[%s759 + $0x8] sm:$0xff]
      %v767 = vld [vmem:[%s759 + $0x10] sm:$0xff]
      %v768 = vld [vmem:[%s759 + $0x18] sm:$0xf]
      %v769 = vld [vmem:[%s1] sm:$0xff]
      %v770 = vld [vmem:[%s1 + $0x8] sm:$0xff]
      %v771 = vld [vmem:[%s1 + $0x10] sm:$0xff]
      %v772 = vld [vmem:[%s1 + $0x18] sm:$0xff]
      %vm773 = vcmask 261120
      %v775 = vsel %vm773, %v765, 0
      %v778 = vsel %vm773, %v766, 0
      %v781 = vsel %vm773, %v767, 0
      %v784 = vsel %vm773, %v768, 0
      %786 = vmatprep.subr.mxu0 0.0
      %787 = vmatpush1.msra.mxu0 %v769
      %788 = vmatprep.subr.mxu0 0.0
      %789 = vmatpush1.msra.mxu0 %v770
      %790 = vmatprep.subr.mxu0 0.0
      %791 = vmatpush1.msra.mxu0 %v771
      %792 = vmatprep.subr.mxu0 0.0
      %793 = vmatpush1.msra.mxu0 %v772
      %794 = vmatprep.subr.mxu0 0.0
      %795 = vmatpush1.msra.mxu0 0.0
      %796 = vmatprep.subr.mxu0 0.0
      %797 = vmatpush1.msra.mxu0 0.0
      %798 = vmatprep.subr.mxu0 0.0
      %799 = vmatpush1.msra.mxu0 0.0
      %800 = vmatprep.subr.mxu0 0.0
      %801 = vmatpush1.msra.mxu0 0.0
      %802 = vmatprep.subr.mxu0 0.0
      %803 = vmatpush1.msra.mxu0 0.0
      %804 = vmatprep.subr.mxu0 0.0
      %805 = vmatpush1.msra.mxu0 0.0
      %806 = vmatprep.subr.mxu0 0.0
      %807 = vmatpush1.msra.mxu0 0.0
      %808 = vmatprep.subr.mxu0 0.0
      %809 = vmatpush1.msra.mxu0 0.0
      %810 = vmatprep.subr.mxu0 0.0
      %811 = vmatpush1.msra.mxu0 0.0
      %812 = vmatprep.subr.mxu0 0.0
      %813 = vmatpush1.msra.mxu0 0.0
      %814 = vmatprep.subr.mxu0 0.0
      %815 = vmatpush1.msra.mxu0 0.0
      %816 = vmatprep.subr.mxu0 0.0
      %817 = vmatpush1.msra.mxu0 0.0
      %818 = vmatprep.subr.mxu0 0.0
      %819 = vmatpush1.msra.mxu0 0.0
      %820 = vmatprep.subr.mxu0 0.0
      %821 = vmatpush1.msra.mxu0 0.0
      %822 = vmatprep.subr.mxu0 0.0
      %823 = vmatpush1.msra.mxu0 0.0
      %824 = vmatprep.subr.mxu0 0.0
      %825 = vmatpush1.msra.mxu0 0.0
      %826 = vmatprep.subr.mxu0 0.0
      %827 = vmatpush1.msra.mxu0 0.0
      %828 = vmatprep.subr.mxu0 0.0
      %829 = vmatpush1.msra.mxu0 0.0
      %830 = vmatprep.subr.mxu0 0.0
      %831 = vmatpush1.msra.mxu0 0.0
      %832 = vmatprep.subr.mxu0 0.0
      %833 = vmatpush1.msra.mxu0 0.0
      %834 = vmatprep.subr.mxu0 0.0
      %835 = vmatpush1.msra.mxu0 0.0
      %836 = vmatprep.subr.mxu0 0.0
      %837 = vmatpush1.msra.mxu0 0.0
      %838 = vmatprep.subr.mxu0 0.0
      %839 = vmatpush1.msra.mxu0 0.0
      %840 = vmatprep.subr.mxu0 0.0
      %841 = vmatpush1.msra.mxu0 0.0
      %842 = vmatprep.subr.mxu0 0.0
      %843 = vmatpush1.msra.mxu0 0.0
      %844 = vmatprep.subr.mxu0 0.0
      %845 = vmatpush1.msra.mxu0 0.0
      %846 = vmatprep.subr.mxu0 0.0
      %847 = vmatpush1.msra.mxu0 0.0
      %848 = vmatprep.subr.mxu0 0.0
      %849 = vmatpush1.msra.mxu0 0.0
      %850 = vmatprep.mubr.f32.mxu0 0.0
      %851 = vmatmul.mubr.f32.gmra.mrb[0].mxu0 %v775
      %v852 = vpop.f32.mrb[0].mxu0
      %v853 = vadd.f32 0.0, %v852
      %v854 = vpop.f32.mrb[0].mxu0
      %855 = vmatprep.mubr.f32.mxu0 0.0
      %856 = vmatmul.mubr.f32.gmra.mrb[0].mxu0 %v778
      %v857 = vpop.f32.mrb[0].mxu0
      %v858 = vadd.f32 0.0, %v857
      %v859 = vpop.f32.mrb[0].mxu0
      %860 = vmatprep.mubr.f32.mxu0 0.0
      %861 = vmatmul.mubr.f32.gmra.mrb[0].mxu0 %v781
      %v862 = vpop.f32.mrb[0].mxu0
      %v863 = vadd.f32 0.0, %v862
      %v864 = vpop.f32.mrb[0].mxu0
      %865 = vmatprep.mubr.f32.mxu0 0.0
      %866 = vmatmul.mubr.f32.gmra.mrb[0].mxu0 %v784
      %v867 = vpop.f32.mrb[0].mxu0
      %v868 = vadd.f32 0.0, %v867
      %v869 = vpop.f32.mrb[0].mxu0
      %870 = vdwg.mxu0
      %v871 = vld [vmem:[%s2] sm:$0xff]
      %v872 = vld [vmem:[%s2 + $0x8] sm:$0xff]
      %v873 = vld [vmem:[%s2 + $0x10] sm:$0xff]
      %v874 = vld [vmem:[%s2 + $0x18] sm:$0xff]
      %875 = vmatprep.subr.mxu0 0.0
      %876 = vmatpush1.msra.mxu0 %v871
      %877 = vmatprep.subr.mxu0 0.0
      %878 = vmatpush1.msra.mxu0 %v872
      %879 = vmatprep.subr.mxu0 0.0
      %880 = vmatpush1.msra.mxu0 %v873
      %881 = vmatprep.subr.mxu0 0.0
      %882 = vmatpush1.msra.mxu0 %v874
      %883 = vmatprep.subr.mxu0 0.0
      %884 = vmatpush1.msra.mxu0 0.0
      %885 = vmatprep.subr.mxu0 0.0
      %886 = vmatpush1.msra.mxu0 0.0
      %887 = vmatprep.subr.mxu0 0.0
      %888 = vmatpush1.msra.mxu0 0.0
      %889 = vmatprep.subr.mxu0 0.0
      %890 = vmatpush1.msra.mxu0 0.0
      %891 = vmatprep.subr.mxu0 0.0
      %892 = vmatpush1.msra.mxu0 0.0
      %893 = vmatprep.subr.mxu0 0.0
      %894 = vmatpush1.msra.mxu0 0.0
      %895 = vmatprep.subr.mxu0 0.0
      %896 = vmatpush1.msra.mxu0 0.0
      %897 = vmatprep.subr.mxu0 0.0
      %898 = vmatpush1.msra.mxu0 0.0
      %899 = vmatprep.subr.mxu0 0.0
      %900 = vmatpush1.msra.mxu0 0.0
      %901 = vmatprep.subr.mxu0 0.0
      %902 = vmatpush1.msra.mxu0 0.0
      %903 = vmatprep.subr.mxu0 0.0
      %904 = vmatpush1.msra.mxu0 0.0
      %905 = vmatprep.subr.mxu0 0.0
      %906 = vmatpush1.msra.mxu0 0.0
      %907 = vmatprep.subr.mxu0 0.0
      %908 = vmatpush1.msra.mxu0 0.0
      %909 = vmatprep.subr.mxu0 0.0
      %910 = vmatpush1.msra.mxu0 0.0
      %911 = vmatprep.subr.mxu0 0.0
      %912 = vmatpush1.msra.mxu0 0.0
      %913 = vmatprep.subr.mxu0 0.0
      %914 = vmatpush1.msra.mxu0 0.0
      %915 = vmatprep.subr.mxu0 0.0
      %916 = vmatpush1.msra.mxu0 0.0
      %917 = vmatprep.subr.mxu0 0.0
      %918 = vmatpush1.msra.mxu0 0.0
      %919 = vmatprep.subr.mxu0 0.0
      %920 = vmatpush1.msra.mxu0 0.0
      %921 = vmatprep.subr.mxu0 0.0
      %922 = vmatpush1.msra.mxu0 0.0
      %923 = vmatprep.subr.mxu0 0.0
      %924 = vmatpush1.msra.mxu0 0.0
      %925 = vmatprep.subr.mxu0 0.0
      %926 = vmatpush1.msra.mxu0 0.0
      %927 = vmatprep.subr.mxu0 0.0
      %928 = vmatpush1.msra.mxu0 0.0
      %929 = vmatprep.subr.mxu0 0.0
      %930 = vmatpush1.msra.mxu0 0.0
      %931 = vmatprep.subr.mxu0 0.0
      %932 = vmatpush1.msra.mxu0 0.0
      %933 = vmatprep.subr.mxu0 0.0
      %934 = vmatpush1.msra.mxu0 0.0
      %935 = vmatprep.subr.mxu0 0.0
      %936 = vmatpush1.msra.mxu0 0.0
      %937 = vmatprep.subr.mxu0 0.0
      %938 = vmatpush1.msra.mxu0 0.0
      %939 = vmatprep.mubr.f32.mxu0 0.0
      %940 = vmatmul.mubr.f32.gmra.mrb[0].mxu0 %v775
      %v941 = vpop.f32.mrb[0].mxu0
      %v942 = vadd.f32 0.0, %v941
      %v943 = vpop.f32.mrb[0].mxu0
      %944 = vmatprep.mubr.f32.mxu0 0.0
      %945 = vmatmul.mubr.f32.gmra.mrb[0].mxu0 %v778
      %v946 = vpop.f32.mrb[0].mxu0
      %v947 = vadd.f32 0.0, %v946
      %v948 = vpop.f32.mrb[0].mxu0
      %949 = vmatprep.mubr.f32.mxu0 0.0
      %950 = vmatmul.mubr.f32.gmra.mrb[0].mxu0 %v781
      %v951 = vpop.f32.mrb[0].mxu0
      %v952 = vadd.f32 0.0, %v951
      %v953 = vpop.f32.mrb[0].mxu0
      %954 = vmatprep.mubr.f32.mxu0 0.0
      %955 = vmatmul.mubr.f32.gmra.mrb[0].mxu0 %v784
      %v956 = vpop.f32.mrb[0].mxu0
      %v957 = vadd.f32 0.0, %v956
      %v958 = vpop.f32.mrb[0].mxu0
      %959 = vdwg.mxu0
      %v960 = vmul.f32 %v853, %v853
      %v961 = vmul.f32 %v858, %v858
      %v962 = vmul.f32 %v863, %v863
      %v963 = vmul.f32 %v868, %v868
      %v964 = vmul.f32 %v942, %v942
      %v965 = vmul.f32 %v947, %v947
      %v966 = vmul.f32 %v952, %v952
      %v967 = vmul.f32 %v957, %v957
      %v968 = vadd.f32 %v960, %v964
      %v969 = vadd.f32 %v961, %v965
      %v970 = vadd.f32 %v962, %v966
      %v971 = vadd.f32 %v963, %v967
      %v972 = vrsqrt.pop %v968
      %v973 = vmul.f32 %v968, %v972
      %vm974 = vcmp.eq.f32.partialorder %v968, inf
      %v975 = vsel %vm974, %v968, %v973
      %vm976 = vcmp.eq.f32.partialorder %v968, 0.0
      %v977 = vand.u32 %v968, 2147483648
      %v978 = vsel %vm976, %v977, %v975
      %v979 = vrsqrt.pop %v969
      %v980 = vmul.f32 %v969, %v979
      %vm981 = vcmp.eq.f32.partialorder %v969, inf
      %v982 = vsel %vm981, %v969, %v980
      %vm983 = vcmp.eq.f32.partialorder %v969, 0.0
      %v984 = vand.u32 %v969, 2147483648
      %v985 = vsel %vm983, %v984, %v982
      %v986 = vrsqrt.pop %v970
      %v987 = vmul.f32 %v970, %v986
      %vm988 = vcmp.eq.f32.partialorder %v970, inf
      %v989 = vsel %vm988, %v970, %v987
      %vm990 = vcmp.eq.f32.partialorder %v970, 0.0
      %v991 = vand.u32 %v970, 2147483648
      %v992 = vsel %vm990, %v991, %v989
      %v993 = vrsqrt.pop %v971
      %v994 = vmul.f32 %v971, %v993
      %vm995 = vcmp.eq.f32.partialorder %v971, inf
      %v996 = vsel %vm995, %v971, %v994
      %vm997 = vcmp.eq.f32.partialorder %v971, 0.0
      %v998 = vand.u32 %v971, 2147483648
      %v999 = vsel %vm997, %v998, %v996
      %p1000 = scmp.ne.s32.totalorder %s36, 0
      %s1001 = scalar_select %p1000, 1, 0
      %s1002 = scvt.s32.f32 %s1001
      %v1003 = vstv %s1002
      %v1004 = vmul.f32 %v978, %v1003
      %v1005 = vmul.f32 %v985, %v1003
      %v1006 = vmul.f32 %v992, %v1003
      %v1007 = vmul.f32 %v999, %v1003
      %vm1008 = vcmp.le.f32.partialorder %v1004, 0.0
      %vm1009 = vcmp.le.f32.partialorder %v1005, 0.0
      %vm1010 = vcmp.le.f32.partialorder %v1006, 0.0
      %vm1011 = vcmp.le.f32.partialorder %v1007, 0.0
      %v1012 = vsel %vm1008, 0.0, %v853
      %v1013 = vsel %vm1009, 0.0, %v858
      %v1014 = vsel %vm1010, 0.0, %v863
      %v1015 = vsel %vm1011, 0.0, %v868
      %v1016 = vsel %vm1008, 0.0, %v942
      %v1017 = vsel %vm1009, 0.0, %v947
      %v1018 = vsel %vm1010, 0.0, %v952
      %v1019 = vsel %vm1011, 0.0, %v957
      %v1020 = vld [vmem:[%s3] sm:$0xff]
      %v1021 = vld [vmem:[%s3 + $0x8] sm:$0xff]
      %v1022 = vld [vmem:[%s3 + $0x10] sm:$0x1]
      %v1023 = vld [vmem:[%s4] sm:$0xff]
      %v1024 = vld [vmem:[%s4 + $0x8] sm:$0xff]
      %v1025 = vld [vmem:[%s4 + $0x10] sm:$0x1]
      %vm1026 = vcmask 138240
      %v1028 = vsel %vm1026, %v1016, 0
      %v1031 = vsel %vm1026, %v1017, 0
      %v1034 = vsel %vm1026, %v1018, 0
      %v1037 = vsel %vm1026, %v1019, 0
      %vm1039 = vcmask 1040384
      %v1041 = vsel %vm1039, %v1025, 0
      %1043 = vmatprep.subr.mxu0 0.0
      %1044 = vmatpush1.msra.mxu0 %v1023
      %1045 = vmatprep.subr.mxu0 0.0
      %1046 = vmatpush1.msra.mxu0 %v1024
      %1047 = vmatprep.subr.mxu0 0.0
      %1048 = vmatpush1.msra.mxu0 %v1041
      %1049 = vmatprep.subr.mxu0 0.0
      %1050 = vmatpush1.msra.mxu0 0.0
      %1051 = vmatprep.subr.mxu0 0.0
      %1052 = vmatpush1.msra.mxu0 0.0
      %1053 = vmatprep.subr.mxu0 0.0
      %1054 = vmatpush1.msra.mxu0 0.0
      %1055 = vmatprep.subr.mxu0 0.0
      %1056 = vmatpush1.msra.mxu0 0.0
      %1057 = vmatprep.subr.mxu0 0.0
      %1058 = vmatpush1.msra.mxu0 0.0
      %1059 = vmatprep.subr.mxu0 0.0
      %1060 = vmatpush1.msra.mxu0 0.0
      %1061 = vmatprep.subr.mxu0 0.0
      %1062 = vmatpush1.msra.mxu0 0.0
      %1063 = vmatprep.subr.mxu0 0.0
      %1064 = vmatpush1.msra.mxu0 0.0
      %1065 = vmatprep.subr.mxu0 0.0
      %1066 = vmatpush1.msra.mxu0 0.0
      %1067 = vmatprep.subr.mxu0 0.0
      %1068 = vmatpush1.msra.mxu0 0.0
      %1069 = vmatprep.subr.mxu0 0.0
      %1070 = vmatpush1.msra.mxu0 0.0
      %1071 = vmatprep.subr.mxu0 0.0
      %1072 = vmatpush1.msra.mxu0 0.0
      %1073 = vmatprep.subr.mxu0 0.0
      %1074 = vmatpush1.msra.mxu0 0.0
      %1075 = vmatprep.subr.mxu0 0.0
      %1076 = vmatpush1.msra.mxu0 0.0
      %1077 = vmatprep.subr.mxu0 0.0
      %1078 = vmatpush1.msra.mxu0 0.0
      %1079 = vmatprep.subr.mxu0 0.0
      %1080 = vmatpush1.msra.mxu0 0.0
      %1081 = vmatprep.subr.mxu0 0.0
      %1082 = vmatpush1.msra.mxu0 0.0
      %1083 = vmatprep.subr.mxu0 0.0
      %1084 = vmatpush1.msra.mxu0 0.0
      %1085 = vmatprep.subr.mxu0 0.0
      %1086 = vmatpush1.msra.mxu0 0.0
      %1087 = vmatprep.subr.mxu0 0.0
      %1088 = vmatpush1.msra.mxu0 0.0
      %1089 = vmatprep.subr.mxu0 0.0
      %1090 = vmatpush1.msra.mxu0 0.0
      %1091 = vmatprep.subr.mxu0 0.0
      %1092 = vmatpush1.msra.mxu0 0.0
      %1093 = vmatprep.subr.mxu0 0.0
      %1094 = vmatpush1.msra.mxu0 0.0
      %1095 = vmatprep.subr.mxu0 0.0
      %1096 = vmatpush1.msra.mxu0 0.0
      %1097 = vmatprep.subr.mxu0 0.0
      %1098 = vmatpush1.msra.mxu0 0.0
      %1099 = vmatprep.subr.mxu0 0.0
      %1100 = vmatpush1.msra.mxu0 0.0
      %1101 = vmatprep.subr.mxu0 0.0
      %1102 = vmatpush1.msra.mxu0 0.0
      %1103 = vmatprep.subr.mxu0 0.0
      %1104 = vmatpush1.msra.mxu0 0.0
      %1105 = vmatprep.subr.mxu0 0.0
      %1106 = vmatpush1.msra.mxu0 0.0
      %1107 = vmatprep.mubr.f32.mxu0 0.0
      %1108 = vmatmul.mubr.f32.gmra.mrb[0].mxu0 %v1028
      %v1109 = vpop.f32.mrb[0].mxu0
      %v1110 = vadd.f32 0.0, %v1109
      %v1111 = vpop.f32.mrb[0].mxu0
      %1112 = vmatprep.mubr.f32.mxu0 0.0
      %1113 = vmatmul.mubr.f32.gmra.mrb[0].mxu0 %v1031
      %v1114 = vpop.f32.mrb[0].mxu0
      %v1115 = vadd.f32 0.0, %v1114
      %v1116 = vpop.f32.mrb[0].mxu0
      %1117 = vmatprep.mubr.f32.mxu0 0.0
      %1118 = vmatmul.mubr.f32.gmra.mrb[0].mxu0 %v1034
      %v1119 = vpop.f32.mrb[0].mxu0
      %v1120 = vadd.f32 0.0, %v1119
      %v1121 = vpop.f32.mrb[0].mxu0
      %1122 = vmatprep.mubr.f32.mxu0 0.0
      %1123 = vmatmul.mubr.f32.gmra.mrb[0].mxu0 %v1037
      %v1124 = vpop.f32.mrb[0].mxu0
      %v1125 = vadd.f32 0.0, %v1124
      %v1126 = vpop.f32.mrb[0].mxu0
      %1127 = vdwg.mxu0
      %v1129 = vsel %vm1026, %v1012, 0
      %v1132 = vsel %vm1026, %v1013, 0
      %v1135 = vsel %vm1026, %v1014, 0
      %v1138 = vsel %vm1026, %v1015, 0
      %v1141 = vsel %vm1039, %v1022, 0
      %1143 = vmatprep.subr.mxu0 0.0
      %1144 = vmatpush1.msra.mxu0 %v1020
      %1145 = vmatprep.subr.mxu0 0.0
      %1146 = vmatpush1.msra.mxu0 %v1021
      %1147 = vmatprep.subr.mxu0 0.0
      %1148 = vmatpush1.msra.mxu0 %v1141
      %1149 = vmatprep.subr.mxu0 0.0
      %1150 = vmatpush1.msra.mxu0 0.0
      %1151 = vmatprep.subr.mxu0 0.0
      %1152 = vmatpush1.msra.mxu0 0.0
      %1153 = vmatprep.subr.mxu0 0.0
      %1154 = vmatpush1.msra.mxu0 0.0
      %1155 = vmatprep.subr.mxu0 0.0
      %1156 = vmatpush1.msra.mxu0 0.0
      %1157 = vmatprep.subr.mxu0 0.0
      %1158 = vmatpush1.msra.mxu0 0.0
      %1159 = vmatprep.subr.mxu0 0.0
      %1160 = vmatpush1.msra.mxu0 0.0
      %1161 = vmatprep.subr.mxu0 0.0
      %1162 = vmatpush1.msra.mxu0 0.0
      %1163 = vmatprep.subr.mxu0 0.0
      %1164 = vmatpush1.msra.mxu0 0.0
      %1165 = vmatprep.subr.mxu0 0.0
      %1166 = vmatpush1.msra.mxu0 0.0
      %1167 = vmatprep.subr.mxu0 0.0
      %1168 = vmatpush1.msra.mxu0 0.0
      %1169 = vmatprep.subr.mxu0 0.0
      %1170 = vmatpush1.msra.mxu0 0.0
      %1171 = vmatprep.subr.mxu0 0.0
      %1172 = vmatpush1.msra.mxu0 0.0
      %1173 = vmatprep.subr.mxu0 0.0
      %1174 = vmatpush1.msra.mxu0 0.0
      %1175 = vmatprep.subr.mxu0 0.0
      %1176 = vmatpush1.msra.mxu0 0.0
      %1177 = vmatprep.subr.mxu0 0.0
      %1178 = vmatpush1.msra.mxu0 0.0
      %1179 = vmatprep.subr.mxu0 0.0
      %1180 = vmatpush1.msra.mxu0 0.0
      %1181 = vmatprep.subr.mxu0 0.0
      %1182 = vmatpush1.msra.mxu0 0.0
      %1183 = vmatprep.subr.mxu0 0.0
      %1184 = vmatpush1.msra.mxu0 0.0
      %1185 = vmatprep.subr.mxu0 0.0
      %1186 = vmatpush1.msra.mxu0 0.0
      %1187 = vmatprep.subr.mxu0 0.0
      %1188 = vmatpush1.msra.mxu0 0.0
      %1189 = vmatprep.subr.mxu0 0.0
      %1190 = vmatpush1.msra.mxu0 0.0
      %1191 = vmatprep.subr.mxu0 0.0
      %1192 = vmatpush1.msra.mxu0 0.0
      %1193 = vmatprep.subr.mxu0 0.0
      %1194 = vmatpush1.msra.mxu0 0.0
      %1195 = vmatprep.subr.mxu0 0.0
      %1196 = vmatpush1.msra.mxu0 0.0
      %1197 = vmatprep.subr.mxu0 0.0
      %1198 = vmatpush1.msra.mxu0 0.0
      %1199 = vmatprep.subr.mxu0 0.0
      %1200 = vmatpush1.msra.mxu0 0.0
      %1201 = vmatprep.subr.mxu0 0.0
      %1202 = vmatpush1.msra.mxu0 0.0
      %1203 = vmatprep.subr.mxu0 0.0
      %1204 = vmatpush1.msra.mxu0 0.0
      %1205 = vmatprep.subr.mxu0 0.0
      %1206 = vmatpush1.msra.mxu0 0.0
      %1207 = vmatprep.mubr.f32.mxu0 0.0
      %1208 = vmatmul.mubr.f32.gmra.mrb[0].mxu0 %v1129
      %v1209 = vpop.f32.mrb[0].mxu0
      %v1210 = vadd.f32 %v1110, %v1209
      %v1211 = vpop.f32.mrb[0].mxu0
      %1212 = vmatprep.mubr.f32.mxu0 0.0
      %1213 = vmatmul.mubr.f32.gmra.mrb[0].mxu0 %v1132
      %v1214 = vpop.f32.mrb[0].mxu0
      %v1215 = vadd.f32 %v1115, %v1214
      %v1216 = vpop.f32.mrb[0].mxu0
      %1217 = vmatprep.mubr.f32.mxu0 0.0
      %1218 = vmatmul.mubr.f32.gmra.mrb[0].mxu0 %v1135
      %v1219 = vpop.f32.mrb[0].mxu0
      %v1220 = vadd.f32 %v1120, %v1219
      %v1221 = vpop.f32.mrb[0].mxu0
      %1222 = vmatprep.mubr.f32.mxu0 0.0
      %1223 = vmatmul.mubr.f32.gmra.mrb[0].mxu0 %v1138
      %v1224 = vpop.f32.mrb[0].mxu0
      %v1225 = vadd.f32 %v1125, %v1224
      %v1226 = vpop.f32.mrb[0].mxu0
      %1227 = vdwg.mxu0
      %v1228 = vsub.f32 %v765, %v1210
      %v1229 = vsub.f32 %v766, %v1215
      %v1230 = vsub.f32 %v767, %v1220
      %v1231 = vsub.f32 %v768, %v1225
      %v1232 = vld [vmem:[%s5] sm:$0xff]
      %v1233 = vld [vmem:[%s6] sm:$0xff]
      %1235 = vset.pattern.permute.xlu0 0
      %1236 = vperm.xlu0 %1235, %v1233
      %v1237 = vpop.permute.xlu0 %1236
      %vm1239 = vcmask 130048
      %v1241 = vsel %vm1239, %v1232, 0
      %1243 = vmatprep.subr.mxu0 0.0
      %1244 = vmatpush1.msra.mxu0 %v1210
      %1245 = vmatprep.subr.mxu0 0.0
      %1246 = vmatpush1.msra.mxu0 %v1215
      %1247 = vmatprep.subr.mxu0 0.0
      %1248 = vmatpush1.msra.mxu0 0.0
      %1249 = vmatprep.subr.mxu0 0.0
      %1250 = vmatpush1.msra.mxu0 0.0
      %1251 = vmatprep.subr.mxu0 0.0
      %1252 = vmatpush1.msra.mxu0 0.0
      %1253 = vmatprep.subr.mxu0 0.0
      %1254 = vmatpush1.msra.mxu0 0.0
      %1255 = vmatprep.subr.mxu0 0.0
      %1256 = vmatpush1.msra.mxu0 0.0
      %1257 = vmatprep.subr.mxu0 0.0
      %1258 = vmatpush1.msra.mxu0 0.0
      %1259 = vmatprep.subr.mxu0 0.0
      %1260 = vmatpush1.msra.mxu0 0.0
      %1261 = vmatprep.subr.mxu0 0.0
      %1262 = vmatpush1.msra.mxu0 0.0
      %1263 = vmatprep.subr.mxu0 0.0
      %1264 = vmatpush1.msra.mxu0 0.0
      %1265 = vmatprep.subr.mxu0 0.0
      %1266 = vmatpush1.msra.mxu0 0.0
      %1267 = vmatprep.subr.mxu0 0.0
      %1268 = vmatpush1.msra.mxu0 0.0
      %1269 = vmatprep.subr.mxu0 0.0
      %1270 = vmatpush1.msra.mxu0 0.0
      %1271 = vmatprep.subr.mxu0 0.0
      %1272 = vmatpush1.msra.mxu0 0.0
      %1273 = vmatprep.subr.mxu0 0.0
      %1274 = vmatpush1.msra.mxu0 0.0
      %1275 = vmatprep.subr.mxu0 0.0
      %1276 = vmatpush1.msra.mxu0 0.0
      %1277 = vmatprep.subr.mxu0 0.0
      %1278 = vmatpush1.msra.mxu0 0.0
      %1279 = vmatprep.subr.mxu0 0.0
      %1280 = vmatpush1.msra.mxu0 0.0
      %1281 = vmatprep.subr.mxu0 0.0
      %1282 = vmatpush1.msra.mxu0 0.0
      %1283 = vmatprep.subr.mxu0 0.0
      %1284 = vmatpush1.msra.mxu0 0.0
      %1285 = vmatprep.subr.mxu0 0.0
      %1286 = vmatpush1.msra.mxu0 0.0
      %1287 = vmatprep.subr.mxu0 0.0
      %1288 = vmatpush1.msra.mxu0 0.0
      %1289 = vmatprep.subr.mxu0 0.0
      %1290 = vmatpush1.msra.mxu0 0.0
      %1291 = vmatprep.subr.mxu0 0.0
      %1292 = vmatpush1.msra.mxu0 0.0
      %1293 = vmatprep.subr.mxu0 0.0
      %1294 = vmatpush1.msra.mxu0 0.0
      %1295 = vmatprep.subr.mxu0 0.0
      %1296 = vmatpush1.msra.mxu0 0.0
      %1297 = vmatprep.subr.mxu0 0.0
      %1298 = vmatpush1.msra.mxu0 0.0
      %1299 = vmatprep.subr.mxu0 0.0
      %1300 = vmatpush1.msra.mxu0 0.0
      %1301 = vmatprep.subr.mxu0 0.0
      %1302 = vmatpush1.msra.mxu0 0.0
      %1303 = vmatprep.subr.mxu0 0.0
      %1304 = vmatpush1.msra.mxu0 0.0
      %1305 = vmatprep.subr.mxu0 0.0
      %1306 = vmatpush1.msra.mxu0 0.0
      %1307 = vmatprep.mubr.f32.mxu0 0.0
      %1308 = vmatmul.mubr.f32.gmra.mrb[0].mxu0 %v1241
      %v1309 = vpop.f32.mrb[0].mxu0
      %v1310 = vadd.f32 %v1237, %v1309
      %v1311 = vpop.f32.mrb[0].mxu0
      %1312 = vdwg.mxu0
      %v1313 = vmul.f32 %v1310, 0.5
      %v1314 = vrcp.pop 1.4142135
      %v1315 = vmul.f32 %v1310, %v1314
      %v1316 = verf.f32.pop %v1315
      %v1317 = vadd.f32 %v1316, 1.0
      %v1318 = vmul.f32 %v1313, %v1317
      %v1319 = vld [vmem:[%s7] sm:$0xff]
      %v1320 = vld [vmem:[%s8] sm:$0xff]
      %1322 = vset.pattern.permute.xlu0 0
      %1323 = vperm.xlu0 %1322, %v1320
      %v1324 = vpop.permute.xlu0 %1323
      %vm1326 = vcmask 64512
      %v1328 = vsel %vm1326, %v1319, 0
      %1330 = vmatprep.subr.mxu0 0.0
      %1331 = vmatpush1.msra.mxu0 %v1318
      %1332 = vmatprep.subr.mxu0 0.0
      %1333 = vmatpush1.msra.mxu0 0.0
      %1334 = vmatprep.subr.mxu0 0.0
      %1335 = vmatpush1.msra.mxu0 0.0
      %1336 = vmatprep.subr.mxu0 0.0
      %1337 = vmatpush1.msra.mxu0 0.0
      %1338 = vmatprep.subr.mxu0 0.0
      %1339 = vmatpush1.msra.mxu0 0.0
      %1340 = vmatprep.subr.mxu0 0.0
      %1341 = vmatpush1.msra.mxu0 0.0
      %1342 = vmatprep.subr.mxu0 0.0
      %1343 = vmatpush1.msra.mxu0 0.0
      %1344 = vmatprep.subr.mxu0 0.0
      %1345 = vmatpush1.msra.mxu0 0.0
      %1346 = vmatprep.subr.mxu0 0.0
      %1347 = vmatpush1.msra.mxu0 0.0
      %1348 = vmatprep.subr.mxu0 0.0
      %1349 = vmatpush1.msra.mxu0 0.0
      %1350 = vmatprep.subr.mxu0 0.0
      %1351 = vmatpush1.msra.mxu0 0.0
      %1352 = vmatprep.subr.mxu0 0.0
      %1353 = vmatpush1.msra.mxu0 0.0
      %1354 = vmatprep.subr.mxu0 0.0
      %1355 = vmatpush1.msra.mxu0 0.0
      %1356 = vmatprep.subr.mxu0 0.0
      %1357 = vmatpush1.msra.mxu0 0.0
      %1358 = vmatprep.subr.mxu0 0.0
      %1359 = vmatpush1.msra.mxu0 0.0
      %1360 = vmatprep.subr.mxu0 0.0
      %1361 = vmatpush1.msra.mxu0 0.0
      %1362 = vmatprep.subr.mxu0 0.0
      %1363 = vmatpush1.msra.mxu0 0.0
      %1364 = vmatprep.subr.mxu0 0.0
      %1365 = vmatpush1.msra.mxu0 0.0
      %1366 = vmatprep.subr.mxu0 0.0
      %1367 = vmatpush1.msra.mxu0 0.0
      %1368 = vmatprep.subr.mxu0 0.0
      %1369 = vmatpush1.msra.mxu0 0.0
      %1370 = vmatprep.subr.mxu0 0.0
      %1371 = vmatpush1.msra.mxu0 0.0
      %1372 = vmatprep.subr.mxu0 0.0
      %1373 = vmatpush1.msra.mxu0 0.0
      %1374 = vmatprep.subr.mxu0 0.0
      %1375 = vmatpush1.msra.mxu0 0.0
      %1376 = vmatprep.subr.mxu0 0.0
      %1377 = vmatpush1.msra.mxu0 0.0
      %1378 = vmatprep.subr.mxu0 0.0
      %1379 = vmatpush1.msra.mxu0 0.0
      %1380 = vmatprep.subr.mxu0 0.0
      %1381 = vmatpush1.msra.mxu0 0.0
      %1382 = vmatprep.subr.mxu0 0.0
      %1383 = vmatpush1.msra.mxu0 0.0
      %1384 = vmatprep.subr.mxu0 0.0
      %1385 = vmatpush1.msra.mxu0 0.0
      %1386 = vmatprep.subr.mxu0 0.0
      %1387 = vmatpush1.msra.mxu0 0.0
      %1388 = vmatprep.subr.mxu0 0.0
      %1389 = vmatpush1.msra.mxu0 0.0
      %1390 = vmatprep.subr.mxu0 0.0
      %1391 = vmatpush1.msra.mxu0 0.0
      %1392 = vmatprep.subr.mxu0 0.0
      %1393 = vmatpush1.msra.mxu0 0.0
      %1394 = vmatprep.mubr.f32.mxu0 0.0
      %1395 = vmatmul.mubr.f32.gmra.mrb[0].mxu0 %v1328
      %v1396 = vpop.f32.mrb[0].mxu0
      %v1397 = vadd.f32 %v1324, %v1396
      %v1398 = vpop.f32.mrb[0].mxu0
      %1399 = vdwg.mxu0
      %v1400 = vadd.f32 %v1220, %v1397
      %v1401 = vld [vmem:[%s9] sm:$0xf]
      %v1402 = vld [vmem:[%s10] sm:$0xf]
      %1404 = vset.pattern.permute.xlu0 0
      %1405 = vperm.xlu0 %1404, %v1402
      %v1406 = vpop.permute.xlu0 %1405
      %v1409 = vsel %vm1326, %v1401, 0
      %1411 = vmatprep.subr.mxu0 0.0
      %1412 = vmatpush1.msra.mxu0 %v1400
      %1413 = vmatprep.subr.mxu0 0.0
      %1414 = vmatpush1.msra.mxu0 0.0
      %1415 = vmatprep.subr.mxu0 0.0
      %1416 = vmatpush1.msra.mxu0 0.0
      %1417 = vmatprep.subr.mxu0 0.0
      %1418 = vmatpush1.msra.mxu0 0.0
      %1419 = vmatprep.subr.mxu0 0.0
      %1420 = vmatpush1.msra.mxu0 0.0
      %1421 = vmatprep.subr.mxu0 0.0
      %1422 = vmatpush1.msra.mxu0 0.0
      %1423 = vmatprep.subr.mxu0 0.0
      %1424 = vmatpush1.msra.mxu0 0.0
      %1425 = vmatprep.subr.mxu0 0.0
      %1426 = vmatpush1.msra.mxu0 0.0
      %1427 = vmatprep.subr.mxu0 0.0
      %1428 = vmatpush1.msra.mxu0 0.0
      %1429 = vmatprep.subr.mxu0 0.0
      %1430 = vmatpush1.msra.mxu0 0.0
      %1431 = vmatprep.subr.mxu0 0.0
      %1432 = vmatpush1.msra.mxu0 0.0
      %1433 = vmatprep.subr.mxu0 0.0
      %1434 = vmatpush1.msra.mxu0 0.0
      %1435 = vmatprep.subr.mxu0 0.0
      %1436 = vmatpush1.msra.mxu0 0.0
      %1437 = vmatprep.subr.mxu0 0.0
      %1438 = vmatpush1.msra.mxu0 0.0
      %1439 = vmatprep.subr.mxu0 0.0
      %1440 = vmatpush1.msra.mxu0 0.0
      %1441 = vmatprep.subr.mxu0 0.0
      %1442 = vmatpush1.msra.mxu0 0.0
      %1443 = vmatprep.subr.mxu0 0.0
      %1444 = vmatpush1.msra.mxu0 0.0
      %1445 = vmatprep.subr.mxu0 0.0
      %1446 = vmatpush1.msra.mxu0 0.0
      %1447 = vmatprep.subr.mxu0 0.0
      %1448 = vmatpush1.msra.mxu0 0.0
      %1449 = vmatprep.subr.mxu0 0.0
      %1450 = vmatpush1.msra.mxu0 0.0
      %1451 = vmatprep.subr.mxu0 0.0
      %1452 = vmatpush1.msra.mxu0 0.0
      %1453 = vmatprep.subr.mxu0 0.0
      %1454 = vmatpush1.msra.mxu0 0.0
      %1455 = vmatprep.subr.mxu0 0.0
      %1456 = vmatpush1.msra.mxu0 0.0
      %1457 = vmatprep.subr.mxu0 0.0
      %1458 = vmatpush1.msra.mxu0 0.0
      %1459 = vmatprep.subr.mxu0 0.0
      %1460 = vmatpush1.msra.mxu0 0.0
      %1461 = vmatprep.subr.mxu0 0.0
      %1462 = vmatpush1.msra.mxu0 0.0
      %1463 = vmatprep.subr.mxu0 0.0
      %1464 = vmatpush1.msra.mxu0 0.0
      %1465 = vmatprep.subr.mxu0 0.0
      %1466 = vmatpush1.msra.mxu0 0.0
      %1467 = vmatprep.subr.mxu0 0.0
      %1468 = vmatpush1.msra.mxu0 0.0
      %1469 = vmatprep.subr.mxu0 0.0
      %1470 = vmatpush1.msra.mxu0 0.0
      %1471 = vmatprep.subr.mxu0 0.0
      %1472 = vmatpush1.msra.mxu0 0.0
      %1473 = vmatprep.subr.mxu0 0.0
      %1474 = vmatpush1.msra.mxu0 0.0
      %1475 = vmatprep.mubr.f32.mxu0 0.0
      %1476 = vmatmul.mubr.f32.gmra.mrb[0].mxu0 %v1409
      %v1477 = vpop.f32.mrb[0].mxu0
      %v1478 = vadd.f32 %v1406, %v1477
      %v1479 = vpop.f32.mrb[0].mxu0
      %1480 = vdwg.mxu0
      %v1481 = vmul.f32 %v1478, 0.5
      %v1482 = vmul.f32 %v1478, %v1314
      %v1483 = verf.f32.pop %v1482
      %v1484 = vadd.f32 %v1483, 1.0
      %v1485 = vmul.f32 %v1481, %v1484
      %v1486 = vld [vmem:[%s11] sm:$0xf]
      %v1487 = vld [vmem:[%s12] sm:$0xf]
      %1489 = vset.pattern.permute.xlu0 0
      %1490 = vperm.xlu0 %1489, %v1487
      %v1491 = vpop.permute.xlu0 %1490
      %vm1493 = vcmask 31744
      %v1495 = vsel %vm1493, %v1486, 0
      %vm1497 = vcmask 1043456
      %v1499 = vsel %vm1497, %v1485, 0
      %1501 = vmatprep.subr.mxu0 0.0
      %1502 = vmatpush1.msra.mxu0 %v1499
      %1503 = vmatprep.subr.mxu0 0.0
      %1504 = vmatpush1.msra.mxu0 0.0
      %1505 = vmatprep.subr.mxu0 0.0
      %1506 = vmatpush1.msra.mxu0 0.0
      %1507 = vmatprep.subr.mxu0 0.0
      %1508 = vmatpush1.msra.mxu0 0.0
      %1509 = vmatprep.subr.mxu0 0.0
      %1510 = vmatpush1.msra.mxu0 0.0
      %1511 = vmatprep.subr.mxu0 0.0
      %1512 = vmatpush1.msra.mxu0 0.0
      %1513 = vmatprep.subr.mxu0 0.0
      %1514 = vmatpush1.msra.mxu0 0.0
      %1515 = vmatprep.subr.mxu0 0.0
      %1516 = vmatpush1.msra.mxu0 0.0
      %1517 = vmatprep.subr.mxu0 0.0
      %1518 = vmatpush1.msra.mxu0 0.0
      %1519 = vmatprep.subr.mxu0 0.0
      %1520 = vmatpush1.msra.mxu0 0.0
      %1521 = vmatprep.subr.mxu0 0.0
      %1522 = vmatpush1.msra.mxu0 0.0
      %1523 = vmatprep.subr.mxu0 0.0
      %1524 = vmatpush1.msra.mxu0 0.0
      %1525 = vmatprep.subr.mxu0 0.0
      %1526 = vmatpush1.msra.mxu0 0.0
      %1527 = vmatprep.subr.mxu0 0.0
      %1528 = vmatpush1.msra.mxu0 0.0
      %1529 = vmatprep.subr.mxu0 0.0
      %1530 = vmatpush1.msra.mxu0 0.0
      %1531 = vmatprep.subr.mxu0 0.0
      %1532 = vmatpush1.msra.mxu0 0.0
      %1533 = vmatprep.subr.mxu0 0.0
      %1534 = vmatpush1.msra.mxu0 0.0
      %1535 = vmatprep.subr.mxu0 0.0
      %1536 = vmatpush1.msra.mxu0 0.0
      %1537 = vmatprep.subr.mxu0 0.0
      %1538 = vmatpush1.msra.mxu0 0.0
      %1539 = vmatprep.subr.mxu0 0.0
      %1540 = vmatpush1.msra.mxu0 0.0
      %1541 = vmatprep.subr.mxu0 0.0
      %1542 = vmatpush1.msra.mxu0 0.0
      %1543 = vmatprep.subr.mxu0 0.0
      %1544 = vmatpush1.msra.mxu0 0.0
      %1545 = vmatprep.subr.mxu0 0.0
      %1546 = vmatpush1.msra.mxu0 0.0
      %1547 = vmatprep.subr.mxu0 0.0
      %1548 = vmatpush1.msra.mxu0 0.0
      %1549 = vmatprep.subr.mxu0 0.0
      %1550 = vmatpush1.msra.mxu0 0.0
      %1551 = vmatprep.subr.mxu0 0.0
      %1552 = vmatpush1.msra.mxu0 0.0
      %1553 = vmatprep.subr.mxu0 0.0
      %1554 = vmatpush1.msra.mxu0 0.0
      %1555 = vmatprep.subr.mxu0 0.0
      %1556 = vmatpush1.msra.mxu0 0.0
      %1557 = vmatprep.subr.mxu0 0.0
      %1558 = vmatpush1.msra.mxu0 0.0
      %1559 = vmatprep.subr.mxu0 0.0
      %1560 = vmatpush1.msra.mxu0 0.0
      %1561 = vmatprep.subr.mxu0 0.0
      %1562 = vmatpush1.msra.mxu0 0.0
      %1563 = vmatprep.subr.mxu0 0.0
      %1564 = vmatpush1.msra.mxu0 0.0
      %1565 = vmatprep.mubr.f32.mxu0 0.0
      %1566 = vmatmul.mubr.f32.gmra.mrb[0].mxu0 %v1495
      %v1567 = vpop.f32.mrb[0].mxu0
      %v1568 = vadd.f32 %v1491, %v1567
      %v1569 = vpop.f32.mrb[0].mxu0
      %1570 = vdwg.mxu0
      %v1571 = vadd.f32 %v1225, %v1568
      %v1572 = vld [vmem:[%s13] sm:$0xff]
      %v1573 = vld [vmem:[%s14] sm:$0xff]
      %1575 = vset.pattern.permute.xlu0 0
      %1576 = vperm.xlu0 %1575, %v1573
      %v1577 = vpop.permute.xlu0 %1576
      %v1580 = vsel %vm1493, %v1572, 0
      %v1583 = vsel %vm1497, %v1231, 0
      %1585 = vmatprep.subr.mxu0 0.0
      %1586 = vmatpush1.msra.mxu0 %v1583
      %1587 = vmatprep.subr.mxu0 0.0
      %1588 = vmatpush1.msra.mxu0 0.0
      %1589 = vmatprep.subr.mxu0 0.0
      %1590 = vmatpush1.msra.mxu0 0.0
      %1591 = vmatprep.subr.mxu0 0.0
      %1592 = vmatpush1.msra.mxu0 0.0
      %1593 = vmatprep.subr.mxu0 0.0
      %1594 = vmatpush1.msra.mxu0 0.0
      %1595 = vmatprep.subr.mxu0 0.0
      %1596 = vmatpush1.msra.mxu0 0.0
      %1597 = vmatprep.subr.mxu0 0.0
      %1598 = vmatpush1.msra.mxu0 0.0
      %1599 = vmatprep.subr.mxu0 0.0
      %1600 = vmatpush1.msra.mxu0 0.0
      %1601 = vmatprep.subr.mxu0 0.0
      %1602 = vmatpush1.msra.mxu0 0.0
      %1603 = vmatprep.subr.mxu0 0.0
      %1604 = vmatpush1.msra.mxu0 0.0
      %1605 = vmatprep.subr.mxu0 0.0
      %1606 = vmatpush1.msra.mxu0 0.0
      %1607 = vmatprep.subr.mxu0 0.0
      %1608 = vmatpush1.msra.mxu0 0.0
      %1609 = vmatprep.subr.mxu0 0.0
      %1610 = vmatpush1.msra.mxu0 0.0
      %1611 = vmatprep.subr.mxu0 0.0
      %1612 = vmatpush1.msra.mxu0 0.0
      %1613 = vmatprep.subr.mxu0 0.0
      %1614 = vmatpush1.msra.mxu0 0.0
      %1615 = vmatprep.subr.mxu0 0.0
      %1616 = vmatpush1.msra.mxu0 0.0
      %1617 = vmatprep.subr.mxu0 0.0
      %1618 = vmatpush1.msra.mxu0 0.0
      %1619 = vmatprep.subr.mxu0 0.0
      %1620 = vmatpush1.msra.mxu0 0.0
      %1621 = vmatprep.subr.mxu0 0.0
      %1622 = vmatpush1.msra.mxu0 0.0
      %1623 = vmatprep.subr.mxu0 0.0
      %1624 = vmatpush1.msra.mxu0 0.0
      %1625 = vmatprep.subr.mxu0 0.0
      %1626 = vmatpush1.msra.mxu0 0.0
      %1627 = vmatprep.subr.mxu0 0.0
      %1628 = vmatpush1.msra.mxu0 0.0
      %1629 = vmatprep.subr.mxu0 0.0
      %1630 = vmatpush1.msra.mxu0 0.0
      %1631 = vmatprep.subr.mxu0 0.0
      %1632 = vmatpush1.msra.mxu0 0.0
      %1633 = vmatprep.subr.mxu0 0.0
      %1634 = vmatpush1.msra.mxu0 0.0
      %1635 = vmatprep.subr.mxu0 0.0
      %1636 = vmatpush1.msra.mxu0 0.0
      %1637 = vmatprep.subr.mxu0 0.0
      %1638 = vmatpush1.msra.mxu0 0.0
      %1639 = vmatprep.subr.mxu0 0.0
      %1640 = vmatpush1.msra.mxu0 0.0
      %1641 = vmatprep.subr.mxu0 0.0
      %1642 = vmatpush1.msra.mxu0 0.0
      %1643 = vmatprep.subr.mxu0 0.0
      %1644 = vmatpush1.msra.mxu0 0.0
      %1645 = vmatprep.subr.mxu0 0.0
      %1646 = vmatpush1.msra.mxu0 0.0
      %1647 = vmatprep.subr.mxu0 0.0
      %1648 = vmatpush1.msra.mxu0 0.0
      %1649 = vmatprep.mubr.f32.mxu0 0.0
      %1650 = vmatmul.mubr.f32.gmra.mrb[0].mxu0 %v1580
      %v1651 = vpop.f32.mrb[0].mxu0
      %v1652 = vadd.f32 %v1577, %v1651
      %v1653 = vpop.f32.mrb[0].mxu0
      %1654 = vdwg.mxu0
      %v1655 = vmul.f32 %v1652, 0.5
      %v1656 = vmul.f32 %v1652, %v1314
      %v1657 = verf.f32.pop %v1656
      %v1658 = vadd.f32 %v1657, 1.0
      %v1659 = vmul.f32 %v1655, %v1658
      %v1660 = vld [vmem:[%s15] sm:$0xff]
      %v1661 = vld [vmem:[%s16] sm:$0xff]
      %1663 = vset.pattern.permute.xlu0 0
      %1664 = vperm.xlu0 %1663, %v1661
      %v1665 = vpop.permute.xlu0 %1664
      %v1668 = vsel %vm1326, %v1660, 0
      %1670 = vmatprep.subr.mxu0 0.0
      %1671 = vmatpush1.msra.mxu0 %v1659
      %1672 = vmatprep.subr.mxu0 0.0
      %1673 = vmatpush1.msra.mxu0 0.0
      %1674 = vmatprep.subr.mxu0 0.0
      %1675 = vmatpush1.msra.mxu0 0.0
      %1676 = vmatprep.subr.mxu0 0.0
      %1677 = vmatpush1.msra.mxu0 0.0
      %1678 = vmatprep.subr.mxu0 0.0
      %1679 = vmatpush1.msra.mxu0 0.0
      %1680 = vmatprep.subr.mxu0 0.0
      %1681 = vmatpush1.msra.mxu0 0.0
      %1682 = vmatprep.subr.mxu0 0.0
      %1683 = vmatpush1.msra.mxu0 0.0
      %1684 = vmatprep.subr.mxu0 0.0
      %1685 = vmatpush1.msra.mxu0 0.0
      %1686 = vmatprep.subr.mxu0 0.0
      %1687 = vmatpush1.msra.mxu0 0.0
      %1688 = vmatprep.subr.mxu0 0.0
      %1689 = vmatpush1.msra.mxu0 0.0
      %1690 = vmatprep.subr.mxu0 0.0
      %1691 = vmatpush1.msra.mxu0 0.0
      %1692 = vmatprep.subr.mxu0 0.0
      %1693 = vmatpush1.msra.mxu0 0.0
      %1694 = vmatprep.subr.mxu0 0.0
      %1695 = vmatpush1.msra.mxu0 0.0
      %1696 = vmatprep.subr.mxu0 0.0
      %1697 = vmatpush1.msra.mxu0 0.0
      %1698 = vmatprep.subr.mxu0 0.0
      %1699 = vmatpush1.msra.mxu0 0.0
      %1700 = vmatprep.subr.mxu0 0.0
      %1701 = vmatpush1.msra.mxu0 0.0
      %1702 = vmatprep.subr.mxu0 0.0
      %1703 = vmatpush1.msra.mxu0 0.0
      %1704 = vmatprep.subr.mxu0 0.0
      %1705 = vmatpush1.msra.mxu0 0.0
      %1706 = vmatprep.subr.mxu0 0.0
      %1707 = vmatpush1.msra.mxu0 0.0
      %1708 = vmatprep.subr.mxu0 0.0
      %1709 = vmatpush1.msra.mxu0 0.0
      %1710 = vmatprep.subr.mxu0 0.0
      %1711 = vmatpush1.msra.mxu0 0.0
      %1712 = vmatprep.subr.mxu0 0.0
      %1713 = vmatpush1.msra.mxu0 0.0
      %1714 = vmatprep.subr.mxu0 0.0
      %1715 = vmatpush1.msra.mxu0 0.0
      %1716 = vmatprep.subr.mxu0 0.0
      %1717 = vmatpush1.msra.mxu0 0.0
      %1718 = vmatprep.subr.mxu0 0.0
      %1719 = vmatpush1.msra.mxu0 0.0
      %1720 = vmatprep.subr.mxu0 0.0
      %1721 = vmatpush1.msra.mxu0 0.0
      %1722 = vmatprep.subr.mxu0 0.0
      %1723 = vmatpush1.msra.mxu0 0.0
      %1724 = vmatprep.subr.mxu0 0.0
      %1725 = vmatpush1.msra.mxu0 0.0
      %1726 = vmatprep.subr.mxu0 0.0
      %1727 = vmatpush1.msra.mxu0 0.0
      %1728 = vmatprep.subr.mxu0 0.0
      %1729 = vmatpush1.msra.mxu0 0.0
      %1730 = vmatprep.subr.mxu0 0.0
      %1731 = vmatpush1.msra.mxu0 0.0
      %1732 = vmatprep.subr.mxu0 0.0
      %1733 = vmatpush1.msra.mxu0 0.0
      %1734 = vmatprep.mubr.f32.mxu0 0.0
      %1735 = vmatmul.mubr.f32.gmra.mrb[0].mxu0 %v1668
      %v1736 = vpop.f32.mrb[0].mxu0
      %v1737 = vadd.f32 %v1665, %v1736
      %v1738 = vpop.f32.mrb[0].mxu0
      %1739 = vdwg.mxu0
      %v1740 = vadd.f32 %v1230, %v1737
      %v1741 = vld [vmem:[%s17] sm:$0xff]
      %v1742 = vld [vmem:[%s17 + $0x8] sm:$0xff]
      %v1743 = vld [vmem:[%s18] sm:$0xff]
      %v1744 = vld [vmem:[%s18 + $0x8] sm:$0xff]
      %1746 = vset.pattern.permute.xlu0 0
      %1747 = vperm.xlu0 %1746, %v1743
      %v1748 = vpop.permute.xlu0 %1747
      %1751 = vset.pattern.permute.xlu0 0
      %1752 = vperm.xlu0 %1751, %v1744
      %v1753 = vpop.permute.xlu0 %1752
      %v1756 = vsel %vm1326, %v1741, 0
      %v1759 = vsel %vm1326, %v1742, 0
      %1761 = vmatprep.subr.mxu0 0.0
      %1762 = vmatpush1.msra.mxu0 %v1740
      %1763 = vmatprep.subr.mxu0 0.0
      %1764 = vmatpush1.msra.mxu0 0.0
      %1765 = vmatprep.subr.mxu0 0.0
      %1766 = vmatpush1.msra.mxu0 0.0
      %1767 = vmatprep.subr.mxu0 0.0
      %1768 = vmatpush1.msra.mxu0 0.0
      %1769 = vmatprep.subr.mxu0 0.0
      %1770 = vmatpush1.msra.mxu0 0.0
      %1771 = vmatprep.subr.mxu0 0.0
      %1772 = vmatpush1.msra.mxu0 0.0
      %1773 = vmatprep.subr.mxu0 0.0
      %1774 = vmatpush1.msra.mxu0 0.0
      %1775 = vmatprep.subr.mxu0 0.0
      %1776 = vmatpush1.msra.mxu0 0.0
      %1777 = vmatprep.subr.mxu0 0.0
      %1778 = vmatpush1.msra.mxu0 0.0
      %1779 = vmatprep.subr.mxu0 0.0
      %1780 = vmatpush1.msra.mxu0 0.0
      %1781 = vmatprep.subr.mxu0 0.0
      %1782 = vmatpush1.msra.mxu0 0.0
      %1783 = vmatprep.subr.mxu0 0.0
      %1784 = vmatpush1.msra.mxu0 0.0
      %1785 = vmatprep.subr.mxu0 0.0
      %1786 = vmatpush1.msra.mxu0 0.0
      %1787 = vmatprep.subr.mxu0 0.0
      %1788 = vmatpush1.msra.mxu0 0.0
      %1789 = vmatprep.subr.mxu0 0.0
      %1790 = vmatpush1.msra.mxu0 0.0
      %1791 = vmatprep.subr.mxu0 0.0
      %1792 = vmatpush1.msra.mxu0 0.0
      %1793 = vmatprep.subr.mxu0 0.0
      %1794 = vmatpush1.msra.mxu0 0.0
      %1795 = vmatprep.subr.mxu0 0.0
      %1796 = vmatpush1.msra.mxu0 0.0
      %1797 = vmatprep.subr.mxu0 0.0
      %1798 = vmatpush1.msra.mxu0 0.0
      %1799 = vmatprep.subr.mxu0 0.0
      %1800 = vmatpush1.msra.mxu0 0.0
      %1801 = vmatprep.subr.mxu0 0.0
      %1802 = vmatpush1.msra.mxu0 0.0
      %1803 = vmatprep.subr.mxu0 0.0
      %1804 = vmatpush1.msra.mxu0 0.0
      %1805 = vmatprep.subr.mxu0 0.0
      %1806 = vmatpush1.msra.mxu0 0.0
      %1807 = vmatprep.subr.mxu0 0.0
      %1808 = vmatpush1.msra.mxu0 0.0
      %1809 = vmatprep.subr.mxu0 0.0
      %1810 = vmatpush1.msra.mxu0 0.0
      %1811 = vmatprep.subr.mxu0 0.0
      %1812 = vmatpush1.msra.mxu0 0.0
      %1813 = vmatprep.subr.mxu0 0.0
      %1814 = vmatpush1.msra.mxu0 0.0
      %1815 = vmatprep.subr.mxu0 0.0
      %1816 = vmatpush1.msra.mxu0 0.0
      %1817 = vmatprep.subr.mxu0 0.0
      %1818 = vmatpush1.msra.mxu0 0.0
      %1819 = vmatprep.subr.mxu0 0.0
      %1820 = vmatpush1.msra.mxu0 0.0
      %1821 = vmatprep.subr.mxu0 0.0
      %1822 = vmatpush1.msra.mxu0 0.0
      %1823 = vmatprep.subr.mxu0 0.0
      %1824 = vmatpush1.msra.mxu0 0.0
      %1825 = vmatprep.mubr.f32.mxu0 0.0
      %1826 = vmatmul.mubr.f32.gmra.mrb[0].mxu0 %v1756
      %v1827 = vpop.f32.mrb[0].mxu0
      %v1828 = vadd.f32 %v1748, %v1827
      %v1829 = vpop.f32.mrb[0].mxu0
      %1830 = vmatprep.mubr.f32.mxu0 0.0
      %1831 = vmatmul.mubr.f32.gmra.mrb[0].mxu0 %v1759
      %v1832 = vpop.f32.mrb[0].mxu0
      %v1833 = vadd.f32 %v1753, %v1832
      %v1834 = vpop.f32.mrb[0].mxu0
      %1835 = vdwg.mxu0
      %v1836 = vmul.f32 %v1828, 0.5
      %v1837 = vmul.f32 %v1833, 0.5
      %v1838 = vmul.f32 %v1828, %v1314
      %v1839 = vmul.f32 %v1833, %v1314
      %v1840 = verf.f32.pop %v1838
      %v1841 = verf.f32.pop %v1839
      %v1842 = vadd.f32 %v1840, 1.0
      %v1843 = vadd.f32 %v1841, 1.0
      %v1844 = vmul.f32 %v1836, %v1842
      %v1845 = vmul.f32 %v1837, %v1843
      %v1846 = vld [vmem:[%s19] sm:$0xff]
      %v1847 = vld [vmem:[%s19 + $0x8] sm:$0xff]
      %v1848 = vld [vmem:[%s20] sm:$0xff]
      %v1849 = vld [vmem:[%s20 + $0x8] sm:$0xff]
      %1851 = vset.pattern.permute.xlu0 0
      %1852 = vperm.xlu0 %1851, %v1848
      %v1853 = vpop.permute.xlu0 %1852
      %1856 = vset.pattern.permute.xlu0 0
      %1857 = vperm.xlu0 %1856, %v1849
      %v1858 = vpop.permute.xlu0 %1857
      %v1861 = vsel %vm1239, %v1846, 0
      %v1864 = vsel %vm1239, %v1847, 0
      %1866 = vmatprep.subr.mxu0 0.0
      %1867 = vmatpush1.msra.mxu0 %v1844
      %1868 = vmatprep.subr.mxu0 0.0
      %1869 = vmatpush1.msra.mxu0 %v1845
      %1870 = vmatprep.subr.mxu0 0.0
      %1871 = vmatpush1.msra.mxu0 0.0
      %1872 = vmatprep.subr.mxu0 0.0
      %1873 = vmatpush1.msra.mxu0 0.0
      %1874 = vmatprep.subr.mxu0 0.0
      %1875 = vmatpush1.msra.mxu0 0.0
      %1876 = vmatprep.subr.mxu0 0.0
      %1877 = vmatpush1.msra.mxu0 0.0
      %1878 = vmatprep.subr.mxu0 0.0
      %1879 = vmatpush1.msra.mxu0 0.0
      %1880 = vmatprep.subr.mxu0 0.0
      %1881 = vmatpush1.msra.mxu0 0.0
      %1882 = vmatprep.subr.mxu0 0.0
      %1883 = vmatpush1.msra.mxu0 0.0
      %1884 = vmatprep.subr.mxu0 0.0
      %1885 = vmatpush1.msra.mxu0 0.0
      %1886 = vmatprep.subr.mxu0 0.0
      %1887 = vmatpush1.msra.mxu0 0.0
      %1888 = vmatprep.subr.mxu0 0.0
      %1889 = vmatpush1.msra.mxu0 0.0
      %1890 = vmatprep.subr.mxu0 0.0
      %1891 = vmatpush1.msra.mxu0 0.0
      %1892 = vmatprep.subr.mxu0 0.0
      %1893 = vmatpush1.msra.mxu0 0.0
      %1894 = vmatprep.subr.mxu0 0.0
      %1895 = vmatpush1.msra.mxu0 0.0
      %1896 = vmatprep.subr.mxu0 0.0
      %1897 = vmatpush1.msra.mxu0 0.0
      %1898 = vmatprep.subr.mxu0 0.0
      %1899 = vmatpush1.msra.mxu0 0.0
      %1900 = vmatprep.subr.mxu0 0.0
      %1901 = vmatpush1.msra.mxu0 0.0
      %1902 = vmatprep.subr.mxu0 0.0
      %1903 = vmatpush1.msra.mxu0 0.0
      %1904 = vmatprep.subr.mxu0 0.0
      %1905 = vmatpush1.msra.mxu0 0.0
      %1906 = vmatprep.subr.mxu0 0.0
      %1907 = vmatpush1.msra.mxu0 0.0
      %1908 = vmatprep.subr.mxu0 0.0
      %1909 = vmatpush1.msra.mxu0 0.0
      %1910 = vmatprep.subr.mxu0 0.0
      %1911 = vmatpush1.msra.mxu0 0.0
      %1912 = vmatprep.subr.mxu0 0.0
      %1913 = vmatpush1.msra.mxu0 0.0
      %1914 = vmatprep.subr.mxu0 0.0
      %1915 = vmatpush1.msra.mxu0 0.0
      %1916 = vmatprep.subr.mxu0 0.0
      %1917 = vmatpush1.msra.mxu0 0.0
      %1918 = vmatprep.subr.mxu0 0.0
      %1919 = vmatpush1.msra.mxu0 0.0
      %1920 = vmatprep.subr.mxu0 0.0
      %1921 = vmatpush1.msra.mxu0 0.0
      %1922 = vmatprep.subr.mxu0 0.0
      %1923 = vmatpush1.msra.mxu0 0.0
      %1924 = vmatprep.subr.mxu0 0.0
      %1925 = vmatpush1.msra.mxu0 0.0
      %1926 = vmatprep.subr.mxu0 0.0
      %1927 = vmatpush1.msra.mxu0 0.0
      %1928 = vmatprep.subr.mxu0 0.0
      %1929 = vmatpush1.msra.mxu0 0.0
      %1930 = vmatprep.mubr.f32.mxu0 0.0
      %1931 = vmatmul.mubr.f32.gmra.mrb[0].mxu0 %v1861
      %v1932 = vpop.f32.mrb[0].mxu0
      %v1933 = vadd.f32 %v1853, %v1932
      %v1934 = vpop.f32.mrb[0].mxu0
      %1935 = vmatprep.mubr.f32.mxu0 0.0
      %1936 = vmatmul.mubr.f32.gmra.mrb[0].mxu0 %v1864
      %v1937 = vpop.f32.mrb[0].mxu0
      %v1938 = vadd.f32 %v1858, %v1937
      %v1939 = vpop.f32.mrb[0].mxu0
      %1940 = vdwg.mxu0
      %v1941 = vadd.f32 %v1228, %v1933
      %v1942 = vadd.f32 %v1229, %v1938
      %v1943 = vadd.f32 %v1210, %v1941
      %v1944 = vadd.f32 %v1215, %v1942
      %1945 = vst.msk [vmem:[#allocation2] sm:$0xff] %vm773, %v1943
      %1946 = vst.msk [vmem:[#allocation2 + $0x8] sm:$0xff] %vm773, %v1944
      %v1947 = vadd.f32 %v1400, %v1740
      %1948 = vst.msk [vmem:[#allocation2 + $0x10] sm:$0xff] %vm773, %v1947
      %v1949 = vadd.f32 %v1571, %v1231
      %vm1950 = vcmask 257024
      %1951 = vst.msk [vmem:[#allocation2 + $0x18] sm:$0xf] %vm1950, %v1949
      %v1952 = vld [vmem:[#allocation2] sm:$0xff]
      %v1953 = vld [vmem:[#allocation2 + $0x8] sm:$0xff]
      %v1954 = vld [vmem:[#allocation2 + $0x10] sm:$0xff]
      %v1955 = vld [vmem:[#allocation2 + $0x18] sm:$0xf]
      %v1956 = vld [vmem:[%s21] sm:$0xff]
      %v1957 = vld [vmem:[%s21 + $0x8] sm:$0xff]
      %v1958 = vld [vmem:[%s21 + $0x10] sm:$0xff]
      %v1959 = vld [vmem:[%s21 + $0x18] sm:$0xff]
      %v1960 = vld [vmem:[%s22] sm:$0x1]
      %v1962 = vlaneseq
      %v1963 = vshrl.u32 %v1962, 7
      %v1964 = vsub.s32 0, %v1963
      %v1965 = vrot.slane %v1960, %v1964
      %v1968 = vsel %vm773, %v1952, 0
      %v1971 = vsel %vm773, %v1953, 0
      %v1974 = vsel %vm773, %v1954, 0
      %v1977 = vsel %vm773, %v1955, 0
      %1979 = vmatprep.subr.mxu0 0.0
      %1980 = vmatpush1.msra.mxu0 %v1956
      %1981 = vmatprep.subr.mxu0 0.0
      %1982 = vmatpush1.msra.mxu0 %v1957
      %1983 = vmatprep.subr.mxu0 0.0
      %1984 = vmatpush1.msra.mxu0 %v1958
      %1985 = vmatprep.subr.mxu0 0.0
      %1986 = vmatpush1.msra.mxu0 %v1959
      %1987 = vmatprep.subr.mxu0 0.0
      %1988 = vmatpush1.msra.mxu0 0.0
      %1989 = vmatprep.subr.mxu0 0.0
      %1990 = vmatpush1.msra.mxu0 0.0
      %1991 = vmatprep.subr.mxu0 0.0
      %1992 = vmatpush1.msra.mxu0 0.0
      %1993 = vmatprep.subr.mxu0 0.0
      %1994 = vmatpush1.msra.mxu0 0.0
      %1995 = vmatprep.subr.mxu0 0.0
      %1996 = vmatpush1.msra.mxu0 0.0
      %1997 = vmatprep.subr.mxu0 0.0
      %1998 = vmatpush1.msra.mxu0 0.0
      %1999 = vmatprep.subr.mxu0 0.0
      %2000 = vmatpush1.msra.mxu0 0.0
      %2001 = vmatprep.subr.mxu0 0.0
      %2002 = vmatpush1.msra.mxu0 0.0
      %2003 = vmatprep.subr.mxu0 0.0
      %2004 = vmatpush1.msra.mxu0 0.0
      %2005 = vmatprep.subr.mxu0 0.0
      %2006 = vmatpush1.msra.mxu0 0.0
      %2007 = vmatprep.subr.mxu0 0.0
      %2008 = vmatpush1.msra.mxu0 0.0
      %2009 = vmatprep.subr.mxu0 0.0
      %2010 = vmatpush1.msra.mxu0 0.0
      %2011 = vmatprep.subr.mxu0 0.0
      %2012 = vmatpush1.msra.mxu0 0.0
      %2013 = vmatprep.subr.mxu0 0.0
      %2014 = vmatpush1.msra.mxu0 0.0
      %2015 = vmatprep.subr.mxu0 0.0
      %2016 = vmatpush1.msra.mxu0 0.0
      %2017 = vmatprep.subr.mxu0 0.0
      %2018 = vmatpush1.msra.mxu0 0.0
      %2019 = vmatprep.subr.mxu0 0.0
      %2020 = vmatpush1.msra.mxu0 0.0
      %2021 = vmatprep.subr.mxu0 0.0
      %2022 = vmatpush1.msra.mxu0 0.0
      %2023 = vmatprep.subr.mxu0 0.0
      %2024 = vmatpush1.msra.mxu0 0.0
      %2025 = vmatprep.subr.mxu0 0.0
      %2026 = vmatpush1.msra.mxu0 0.0
      %2027 = vmatprep.subr.mxu0 0.0
      %2028 = vmatpush1.msra.mxu0 0.0
      %2029 = vmatprep.subr.mxu0 0.0
      %2030 = vmatpush1.msra.mxu0 0.0
      %2031 = vmatprep.subr.mxu0 0.0
      %2032 = vmatpush1.msra.mxu0 0.0
      %2033 = vmatprep.subr.mxu0 0.0
      %2034 = vmatpush1.msra.mxu0 0.0
      %2035 = vmatprep.subr.mxu0 0.0
      %2036 = vmatpush1.msra.mxu0 0.0
      %2037 = vmatprep.subr.mxu0 0.0
      %2038 = vmatpush1.msra.mxu0 0.0
      %2039 = vmatprep.subr.mxu0 0.0
      %2040 = vmatpush1.msra.mxu0 0.0
      %2041 = vmatprep.subr.mxu0 0.0
      %2042 = vmatpush1.msra.mxu0 0.0
      %2043 = vmatprep.mubr.f32.mxu0 0.0
      %2044 = vmatmul.mubr.f32.gmra.mrb[0].mxu0 %v1968
      %v2045 = vpop.f32.mrb[0].mxu0
      %v2046 = vadd.f32 %v1965, %v2045
      %v2047 = vpop.f32.mrb[0].mxu0
      %2048 = vmatprep.mubr.f32.mxu0 0.0
      %2049 = vmatmul.mubr.f32.gmra.mrb[0].mxu0 %v1971
      %v2050 = vpop.f32.mrb[0].mxu0
      %v2051 = vadd.f32 %v1965, %v2050
      %v2052 = vpop.f32.mrb[0].mxu0
      %2053 = vmatprep.mubr.f32.mxu0 0.0
      %2054 = vmatmul.mubr.f32.gmra.mrb[0].mxu0 %v1974
      %v2055 = vpop.f32.mrb[0].mxu0
      %v2056 = vadd.f32 %v1965, %v2055
      %v2057 = vpop.f32.mrb[0].mxu0
      %2058 = vmatprep.mubr.f32.mxu0 0.0
      %2059 = vmatmul.mubr.f32.gmra.mrb[0].mxu0 %v1977
      %v2060 = vpop.f32.mrb[0].mxu0
      %v2061 = vadd.f32 %v1965, %v2060
      %v2062 = vpop.f32.mrb[0].mxu0
      %2063 = vdwg.mxu0
      %v2064 = vmul.f32 %v2046, 0.5
      %v2065 = vmul.f32 %v2051, 0.5
      %v2066 = vmul.f32 %v2056, 0.5
      %v2067 = vmul.f32 %v2061, 0.5
      %v2068 = vmul.f32 %v2046, %v1314
      %v2069 = vmul.f32 %v2051, %v1314
      %v2070 = vmul.f32 %v2056, %v1314
      %v2071 = vmul.f32 %v2061, %v1314
      %v2072 = verf.f32.pop %v2068
      %v2073 = verf.f32.pop %v2069
      %v2074 = verf.f32.pop %v2070
      %v2075 = verf.f32.pop %v2071
      %v2076 = vadd.f32 %v2072, 1.0
      %v2077 = vadd.f32 %v2073, 1.0
      %v2078 = vadd.f32 %v2074, 1.0
      %v2079 = vadd.f32 %v2075, 1.0
      %v2080 = vmul.f32 %v2064, %v2076
      %v2081 = vmul.f32 %v2065, %v2077
      %v2082 = vmul.f32 %v2066, %v2078
      %v2083 = vmul.f32 %v2067, %v2079
      %v2084 = vld [vmem:[%s23] sm:$0xff]
      %v2085 = vld [vmem:[%s23 + $0x8] sm:$0xff]
      %v2086 = vld [vmem:[%s23 + $0x10] sm:$0xff]
      %v2087 = vld [vmem:[%s23 + $0x18] sm:$0xff]
      %v2088 = vld [vmem:[%s23 + $0x20] sm:$0xff]
      %v2089 = vld [vmem:[%s23 + $0x28] sm:$0xff]
      %v2090 = vld [vmem:[%s23 + $0x30] sm:$0xff]
      %v2091 = vld [vmem:[%s23 + $0x38] sm:$0xff]
      %v2092 = vld [vmem:[%s24] sm:$0x1]
      %v2094 = vlaneseq
      %v2095 = vshrl.u32 %v2094, 7
      %v2096 = vsub.s32 0, %v2095
      %v2097 = vrot.slane %v2092, %v2096
      %vm2099 = vcmask 523264
      %v2101 = vsel %vm2099, %v2080, 0
      %v2104 = vsel %vm2099, %v2081, 0
      %v2107 = vsel %vm2099, %v2082, 0
      %v2110 = vsel %vm2099, %v2083, 0
      %2112 = vmatprep.subr.mxu0 0.0
      %2113 = vmatpush1.msra.mxu0 %v2084
      %2114 = vmatprep.subr.mxu0 0.0
      %2115 = vmatpush1.msra.mxu0 %v2085
      %2116 = vmatprep.subr.mxu0 0.0
      %2117 = vmatpush1.msra.mxu0 %v2086
      %2118 = vmatprep.subr.mxu0 0.0
      %2119 = vmatpush1.msra.mxu0 %v2087
      %2120 = vmatprep.subr.mxu0 0.0
      %2121 = vmatpush1.msra.mxu0 %v2088
      %2122 = vmatprep.subr.mxu0 0.0
      %2123 = vmatpush1.msra.mxu0 %v2089
      %2124 = vmatprep.subr.mxu0 0.0
      %2125 = vmatpush1.msra.mxu0 %v2090
      %2126 = vmatprep.subr.mxu0 0.0
      %2127 = vmatpush1.msra.mxu0 %v2091
      %2128 = vmatprep.subr.mxu0 0.0
      %2129 = vmatpush1.msra.mxu0 0.0
      %2130 = vmatprep.subr.mxu0 0.0
      %2131 = vmatpush1.msra.mxu0 0.0
      %2132 = vmatprep.subr.mxu0 0.0
      %2133 = vmatpush1.msra.mxu0 0.0
      %2134 = vmatprep.subr.mxu0 0.0
      %2135 = vmatpush1.msra.mxu0 0.0
      %2136 = vmatprep.subr.mxu0 0.0
      %2137 = vmatpush1.msra.mxu0 0.0
      %2138 = vmatprep.subr.mxu0 0.0
      %2139 = vmatpush1.msra.mxu0 0.0
      %2140 = vmatprep.subr.mxu0 0.0
      %2141 = vmatpush1.msra.mxu0 0.0
      %2142 = vmatprep.subr.mxu0 0.0
      %2143 = vmatpush1.msra.mxu0 0.0
      %2144 = vmatprep.subr.mxu0 0.0
      %2145 = vmatpush1.msra.mxu0 0.0
      %2146 = vmatprep.subr.mxu0 0.0
      %2147 = vmatpush1.msra.mxu0 0.0
      %2148 = vmatprep.subr.mxu0 0.0
      %2149 = vmatpush1.msra.mxu0 0.0
      %2150 = vmatprep.subr.mxu0 0.0
      %2151 = vmatpush1.msra.mxu0 0.0
      %2152 = vmatprep.subr.mxu0 0.0
      %2153 = vmatpush1.msra.mxu0 0.0
      %2154 = vmatprep.subr.mxu0 0.0
      %2155 = vmatpush1.msra.mxu0 0.0
      %2156 = vmatprep.subr.mxu0 0.0
      %2157 = vmatpush1.msra.mxu0 0.0
      %2158 = vmatprep.subr.mxu0 0.0
      %2159 = vmatpush1.msra.mxu0 0.0
      %2160 = vmatprep.subr.mxu0 0.0
      %2161 = vmatpush1.msra.mxu0 0.0
      %2162 = vmatprep.subr.mxu0 0.0
      %2163 = vmatpush1.msra.mxu0 0.0
      %2164 = vmatprep.subr.mxu0 0.0
      %2165 = vmatpush1.msra.mxu0 0.0
      %2166 = vmatprep.subr.mxu0 0.0
      %2167 = vmatpush1.msra.mxu0 0.0
      %2168 = vmatprep.subr.mxu0 0.0
      %2169 = vmatpush1.msra.mxu0 0.0
      %2170 = vmatprep.subr.mxu0 0.0
      %2171 = vmatpush1.msra.mxu0 0.0
      %2172 = vmatprep.subr.mxu0 0.0
      %2173 = vmatpush1.msra.mxu0 0.0
      %2174 = vmatprep.subr.mxu0 0.0
      %2175 = vmatpush1.msra.mxu0 0.0
      %2176 = vmatprep.mubr.f32.mxu0 0.0
      %2177 = vmatmul.mubr.f32.gmra.mrb[0].mxu0 %v2101
      %v2178 = vpop.f32.mrb[0].mxu0
      %v2179 = vadd.f32 %v2097, %v2178
      %v2180 = vpop.f32.mrb[0].mxu0
      %2181 = vmatprep.mubr.f32.mxu0 0.0
      %2182 = vmatmul.mubr.f32.gmra.mrb[0].mxu0 %v2104
      %v2183 = vpop.f32.mrb[0].mxu0
      %v2184 = vadd.f32 %v2097, %v2183
      %v2185 = vpop.f32.mrb[0].mxu0
      %2186 = vmatprep.mubr.f32.mxu0 0.0
      %2187 = vmatmul.mubr.f32.gmra.mrb[0].mxu0 %v2107
      %v2188 = vpop.f32.mrb[0].mxu0
      %v2189 = vadd.f32 %v2097, %v2188
      %v2190 = vpop.f32.mrb[0].mxu0
      %2191 = vmatprep.mubr.f32.mxu0 0.0
      %2192 = vmatmul.mubr.f32.gmra.mrb[0].mxu0 %v2110
      %v2193 = vpop.f32.mrb[0].mxu0
      %v2194 = vadd.f32 %v2097, %v2193
      %v2195 = vpop.f32.mrb[0].mxu0
      %2196 = vdwg.mxu0
      %v2197 = vadd.f32 %v765, %v2179
      %v2198 = vadd.f32 %v766, %v2184
      %v2199 = vadd.f32 %v767, %v2189
      %v2200 = vadd.f32 %v768, %v2194
      %2201 = vst.msk [vmem:[%s764] sm:$0xff] %vm773, %v2197
      %2202 = vst.msk [vmem:[%s764 + $0x8] sm:$0xff] %vm773, %v2198
      %2203 = vst.msk [vmem:[%s764 + $0x10] sm:$0xff] %vm773, %v2199
      %2204 = vst.msk [vmem:[%s764 + $0x18] sm:$0xf] %vm1950, %v2200
      %p2205 = scmp.lt.s32.totalorder %s36, 1
      %s2206 = scalar_select %p2205, %s36, 1
      %s2207 = smul.addr %s2206, 4
      %s2208 = smul.addr %s2207, 8
      %s2209 = scalar_lea.vmem %s25, %s2208
      // Predicated region
      $region121: #{tpu_custom_call.1} parent=119 // pred_check
        %p2210 = pneg %p584
      $region122: #{tpu_custom_call.1} parent=119 // pred_check_branch
        %2212 = sbr.rel (%p2210) target = $region124
      $region123: #{tpu_custom_call.1} parent=119 // pred_region
        _
      $region124: #{tpu_custom_call.1} parent=119 // pred_fallthru
        _
    $region120: #{tpu_custom_call.1} parent=5 // pred_fallthru
      _
    %p2213 = scmp.le.s32.totalorder 2, %s31
    // Predicated region
    $region125: #{tpu_custom_call.1} parent=5 // pred_check
      %p2214 = pneg %p2213
    $region126: #{tpu_custom_call.1} parent=5 // pred_check_branch
      %2216 = sbr.rel (%p2214) target = $region128
    $region127: #{tpu_custom_call.1} parent=5 // pred_region
      %s2217 = ssub.s32 %s31, 2
      // Predicated region
      $region129: #{tpu_custom_call.1} parent=127 // pred_check
        %p2218 = pneg %p590
      $region130: #{tpu_custom_call.1} parent=127 // pred_check_branch
        %2220 = sbr.rel (%p2218) target = $region132
      $region131: #{tpu_custom_call.1} parent=127 // pred_region
        %p2221 = scmp.lt.s32.totalorder %s37, 1
        %s2222 = scalar_select %p2221, %s37, 1
        %s2223 = smul.addr %s2222, 4
        %s2224 = smul.addr %s2223, 8
        %s2225 = scalar_lea.vmem %s25, %s2224
      $region132: #{tpu_custom_call.1} parent=127 // pred_fallthru
        _
    $region128: #{tpu_custom_call.1} parent=5 // pred_fallthru
      _
  $region6: #{tpu_custom_call.1} parent=0 // loop_footer
    %s35 = sadd.s32 1, %s31
  $region7: #{tpu_custom_call.1} parent=0 // loop_footer_branch
    %30 = sbr.rel target = $region3
  $region8: #{tpu_custom_call.1} parent=0 // loop_exit
    _

</llo_original>
